<compile_context>
chip_gen: v7x
topology: tpu7x:2x2x1
jax: 0.10.0
libtpu: 0.0.40
codegen_flags: <defaults>
</compile_context>

<pallas_src>
import functools
import math

import jax
import jax.numpy as jnp
from jax.experimental import pallas as pl
from jax.experimental.pallas import tpu as pltpu


# ---------------------------------------------------------------------------
# Kernel
# ---------------------------------------------------------------------------
def _ntn_kernel(x1_ref, x2t_ref, wa_ref, o_ref, *scratch, tk, dp, act, cache_t):
    """One grid step -> output tile o[b0:b0+BB, k0:k0+TK, i0:i0+TL1, j0:j0+TL2].

    x1_ref : (BB, TL1, dp)      matmul dtype; augmented x1 = [x1 | 1 | 0-pad]
    x2t_ref: (BB, dp,  TL2)     matmul dtype; augmented x2, transposed
    wa_ref : (dp, TK*dp)        matmul dtype; [Wa_k0 | Wa_k0+1 | ...] where
                                Wa_k = [[W_k, V1_k^T], [V2_k, b_k]], 0-padded.
    o_ref  : (BB, TK, TL1, TL2) output dtype
    scratch: optionally (BB, TL1, TK*dp) VMEM caching the first-stage result
             across the innermost (L2) grid axis.
    """
    bb = x1_ref.shape[0]
    cdt = wa_ref.dtype  # MXU-input dtype (bf16 default; f32 for the exact path)

    if cache_t:
        t_scr, = scratch

        # First-stage result depends only on (batch, k-block, L1-tile);
        # recompute once per sweep of the innermost (L2) grid axis.
        @pl.when(pl.program_id(3) == 0)
        def _():
            wa = wa_ref[...]
            for b_i in range(bb):
                t = jnp.dot(x1_ref[b_i], wa, preferred_element_type=jnp.float32)
                t_scr[b_i] = t.astype(cdt)

        for b_i in range(bb):
            x2b = x2t_ref[b_i]                                    # (dp, TL2)
            for kk in range(tk):
                lhs = t_scr[b_i, :, kk * dp:(kk + 1) * dp]        # lane-aligned
                s = jnp.dot(lhs, x2b, preferred_element_type=jnp.float32)
                o_ref[b_i, kk] = act(s).astype(o_ref.dtype)
    else:
        wa = wa_ref[...]
        for b_i in range(bb):
            x1b = x1_ref[b_i]                                     # (TL1, dp)
            x2b = x2t_ref[b_i]                                    # (dp, TL2)
            # One wide MXU GEMM: [x1a@Wa_0 | x1a@Wa_1 | ...]; bilinear + both
            # linear terms + bias are all folded in via the augmented feature.
            t = jnp.dot(x1b, wa, preferred_element_type=jnp.float32)  # (TL1, TK*dp)
            t_c = t.astype(cdt)               # single cast, hoisted out of kk loop
            for kk in range(tk):
                lhs = t_c[:, kk * dp:(kk + 1) * dp]               # lane-aligned
                s = jnp.dot(lhs, x2b, preferred_element_type=jnp.float32)
                o_ref[b_i, kk] = act(s).astype(o_ref.dtype)


# ---------------------------------------------------------------------------
# Helpers
# ---------------------------------------------------------------------------
def _round_up(x, m):
    return ((x + m - 1) // m) * m


def _largest_divisor_le(n, cap):
    cap = max(1, min(n, cap))
    for c in range(cap, 0, -1):
        if n % c == 0:
            return c
    return 1


def _next_smaller_divisor(n, cur):
    for c in range(cur - 1, 0, -1):
        if n % c == 0:
            return c
    return 1


def _augment(x, dp, dtype):
    """[x | 1 | zeros] along the feature axis, padded to dp (multiple of 128)."""
    B, L, d = x.shape
    parts = [x.astype(dtype), jnp.ones((B, L, 1), dtype)]
    if dp > d + 1:
        parts.append(jnp.zeros((B, L, dp - d - 1), dtype))
    return jnp.concatenate(parts, axis=-1)


def pack_ntn_params(W, V, b, matmul_dtype=jnp.bfloat16):
    """Pack (W, V, b) into one augmented weight matrix wa of shape (dp, k*dp).

    wa[:, kk*dp:(kk+1)*dp] = [[W_k, V1_k^T], [V2_k, b_k]] zero-padded, with
    dp = round_up(d+1, 128) so per-k slices are 128-lane aligned.  For static
    module parameters, call this once and reuse via neural_tensor_network_packed.
    """
    k, d, _ = W.shape
    dp = _round_up(d + 1, 128)
    wa = jnp.zeros((k, dp, dp), jnp.float32)
    wa = wa.at[:, :d, :d].set(W.astype(jnp.float32))
    wa = wa.at[:, :d, d].set(V[:, :d].astype(jnp.float32))
    wa = wa.at[:, d, :d].set(V[:, d:].astype(jnp.float32))
    wa = wa.at[:, d, d].set(b.astype(jnp.float32))
    wa = jnp.transpose(wa, (1, 0, 2)).reshape(dp, k * dp).astype(matmul_dtype)
    return wa, k, d, dp


# ---------------------------------------------------------------------------
# Wrappers
# ---------------------------------------------------------------------------
def neural_tensor_network_packed(x1, x2, wa, *, k, d, dp, activation="relu",
                                 out_dtype=jnp.bfloat16,
                                 tile_l1=None, tile_l2=None):
    """Pallas NTN forward with pre-packed weights. Returns [B, k, L1, L2]."""
    B, L1, d1 = x1.shape
    B2, L2, d2 = x2.shape
    assert B == B2 and d1 == d2 == d, "batch / feature dims must match"
    assert wa.shape == (dp, k * dp)

    if activation == "relu":
        act = lambda z: jnp.maximum(z, 0.0)
    elif activation == "tanh":
        act = jnp.tanh
    else:
        raise ValueError(f"Activation type {activation} is not supported yet!")

    # --- hardware / VMEM budget -------------------------------------------
    try:
        vmem_cap = int(pltpu.get_tpu_info().vmem_capacity_bytes)
    except Exception:
        vmem_cap = 64 << 20              # conservative (v7x per-core VMEM)
    budget = int(0.8 * vmem_cap)         # headroom for compiler-internal scratch

    # --- tiling (generation-aware defaults) --------------------------------
    if tile_l1 is None:
        tile_l1 = 256
    if tile_l2 is None:
        # 128 MiB parts (v5e/v6e) afford a larger lane-dense output tile;
        # keep 512 lanes for v7x's 64 MiB VMEM.
        tile_l2 = 1024 if vmem_cap >= (100 << 20) else 512

    tl1 = L1 if L1 <= tile_l1 else max(8, (tile_l1 // 8) * 8)
    tl2 = L2 if L2 <= tile_l2 else max(128, (tile_l2 // 128) * 128)
    tk = k
    # Batch block amortizes per-grid-step overhead for small tiles; capped at 4
    # to bound the static bb*tk unroll (vreg pressure / spills).
    bb = _largest_divisor_le(B, max(1, min(4, (256 * 512) // max(1, tl1 * tl2))))

    mdt = wa.dtype
    in_elt = jnp.dtype(mdt).itemsize
    out_elt = jnp.dtype(out_dtype).itemsize

    def _cache(tl2_):
        # Cache the first-stage result when recomputing it per L2 tile would be
        # a significant fraction of the main bilinear work.
        return (2 * dp >= tl2_) and (pl.cdiv(L2, tl2_) > 1)

    def _est(bb_, tk_, tl1_, tl2_):
        blk = (bb_ * tl1_ * dp * in_elt            # x1a tile
               + bb_ * dp * tl2_ * in_elt          # x2a^T tile
               + dp * tk_ * dp * in_elt            # weight block
               + bb_ * tk_ * tl1_ * tl2_ * out_elt)  # output tile
        scr = bb_ * tl1_ * tk_ * dp * in_elt if _cache(tl2_) else 0
        return 2 * blk + scr + (2 << 20)           # double buffers + slack

    # Tile-shrink loop: prefer k-tiling (keeps L2 lane-dense), then L2, L1, bb.
    for _ in range(64):
        if _est(bb, tk, tl1, tl2) <= budget:
            break
        if tk > 1:
            tk = _next_smaller_divisor(k, tk)
        elif tl2 > 128 and tl2 % 256 == 0:
            tl2 //= 2
        elif tl1 > 8 and tl1 % 16 == 0:
            tl1 //= 2
        elif bb > 1:
            bb = _largest_divisor_le(B, bb // 2)
        else:
            # TODO(synk): for very large d (a single (dp, dp) weight block alone
            # exceeding the budget) add an "arbitrary" d-contraction grid axis
            # with an f32 accumulator scratch.
            break

    nb, nk, n1, n2 = B // bb, k // tk, pl.cdiv(L1, tl1), pl.cdiv(L2, tl2)
    cache_t = _cache(tl2)

    est = _est(bb, tk, tl1, tl2)
    # Always set an explicit scoped-VMEM limit (v5e's default is only 16 MiB),
    # capped with headroom below the chip's physical capacity.
    vmem_limit = int(min(budget, max(est, 32 << 20)))

    # --- operands -----------------------------------------------------------
    x1a = _augment(x1, dp, mdt)                       # (B, L1, dp)
    x2at = jnp.swapaxes(_augment(x2, dp, mdt), 1, 2)  # (B, dp, L2)

    kernel = functools.partial(_ntn_kernel, tk=tk, dp=dp, act=act, cache_t=cache_t)
    dims = ("parallel", "parallel", "parallel",
            "arbitrary" if cache_t else "parallel")
    scratch = [pltpu.VMEM((bb, tl1, tk * dp), mdt)] if cache_t else []

    cost = pl.CostEstimate(
        flops=int(2.0 * B * L1 * dp * (k * dp) + 2.0 * B * k * L1 * L2 * dp),
        transcendentals=int(B * k * L1 * L2) if activation == "tanh" else 0,
        bytes_accessed=int(B * L1 * dp * in_elt + B * dp * L2 * in_elt
                           + dp * k * dp * in_elt + B * k * L1 * L2 * out_elt))

    return pl.pallas_call(
        kernel,
        out_shape=jax.ShapeDtypeStruct((B, k, L1, L2), out_dtype),
        grid=(nb, nk, n1, n2),
        in_specs=[
            pl.BlockSpec((bb, tl1, dp), lambda bi, kb, i, j: (bi, i, 0)),
            pl.BlockSpec((bb, dp, tl2), lambda bi, kb, i, j: (bi, 0, j)),
            pl.BlockSpec((dp, tk * dp), lambda bi, kb, i, j: (0, kb)),
        ],
        out_specs=pl.BlockSpec((bb, tk, tl1, tl2),
                               lambda bi, kb, i, j: (bi, kb, i, j)),
        scratch_shapes=scratch,
        compiler_params=pltpu.CompilerParams(
            dimension_semantics=dims, vmem_limit_bytes=vmem_limit),
        cost_estimate=cost,
    )(x1a, x2at, wa)


def neural_tensor_network(x1, x2, W, V, b, activation="relu",
                          out_dtype=jnp.bfloat16, matmul_dtype=jnp.bfloat16,
                          tile_l1=None, tile_l2=None):
    """Convenience wrapper: packs (W, V, b) then runs the Pallas kernel.

    Note: out_dtype defaults to bf16 (the kernel is HBM-writeback bound); pass
    out_dtype=jnp.float32 / matmul_dtype=jnp.float32 for closer f32 parity.
    """
    assert x1.shape[-1] == x2.shape[-1] == W.shape[1]
    assert x1.shape[0] == x2.shape[0]
    wa, k, d, dp = pack_ntn_params(W, V, b, matmul_dtype=matmul_dtype)
    return neural_tensor_network_packed(
        x1, x2, wa, k=k, d=d, dp=dp, activation=activation,
        out_dtype=out_dtype, tile_l1=tile_l1, tile_l2=tile_l2)


# ---------------------------------------------------------------------------
# Reference + init + test
# ---------------------------------------------------------------------------
def _ntn_reference(x1, x2, W, V, b, activation="relu"):
    d = x1.shape[-1]
    bilinear = jnp.einsum("bld,kde,bme->bklm", x1, W, x2)
    lin1 = jnp.einsum("bld,kd->bkl", x1, V[:, :d])
    lin2 = jnp.einsum("bmd,kd->bkm", x2, V[:, d:])
    pre = bilinear + lin1[:, :, :, None] + lin2[:, :, None, :] + b[None, :, None, None]
    return jnp.maximum(pre, 0.0) if activation == "relu" else jnp.tanh(pre)


def _kaiming_uniform(key, shape, a=math.sqrt(5)):
    receptive = 1
    for s in shape[2:]:
        receptive *= s
    fan_in = shape[1] * receptive
    gain = math.sqrt(2.0 / (1.0 + a * a))
    bound = gain * math.sqrt(3.0 / fan_in)
    return jax.random.uniform(key, shape, jnp.float32, -bound, bound)


if __name__ == "__main__":
    B, L1, L2, d, k = 2, 16, 512, 32, 4

    key = jax.random.PRNGKey(0)
    k_x1, k_x2, k_w, k_v, k_b = jax.random.split(key, 5)

    x1 = jax.random.normal(k_x1, (B, L1, d), jnp.float32)
    x2 = jax.random.normal(k_x2, (B, L2, d), jnp.float32)

    # Deterministic parameter init mirroring reset_parameters()
    W = _kaiming_uniform(k_w, (k, d, d))
    V = _kaiming_uniform(k_v, (k, 2 * d))
    b_bound = 1.0 / math.sqrt(2 * d)
    b = jax.random.uniform(k_b, (k,), jnp.float32, -b_bound, b_bound)

    ref = _ntn_reference(x1, x2, W, V, b, activation="relu")

    # 1) Default path: bf16 output (writeback-bound -> halves HBM traffic).
    out = neural_tensor_network(x1, x2, W, V, b, activation="relu")
    out = jax.block_until_ready(out)
    assert out.shape == (B, k, L1, L2), out.shape
    assert out.dtype == jnp.bfloat16, out.dtype
    assert jnp.allclose(out.astype(jnp.float32), ref, rtol=5e-2, atol=5e-2), \
        float(jnp.max(jnp.abs(out.astype(jnp.float32) - ref)))

    # 2) Small-L2-tile / f32-output config: exercises the cached-first-stage
    #    ("arbitrary" L2 axis) path and the f32 output knob.
    out2 = neural_tensor_network(x1, x2, W, V, b, activation="relu",
                                 out_dtype=jnp.float32, tile_l2=128)
    out2 = jax.block_until_ready(out2)
    assert out2.shape == (B, k, L1, L2) and out2.dtype == jnp.float32
    assert jnp.allclose(out2, ref, rtol=3e-2, atol=3e-2), \
        float(jnp.max(jnp.abs(out2 - ref)))

    print("KERNEL_OK")
</pallas_src>

<mosaic_0001>
module attributes {stable_mosaic.version = 11 : i64} {
  func.func @_ntn_kernel(%arg0: i32, %arg1: i32, %arg2: i32, %arg3: i32, %arg4: memref<2x16x128xbf16, #tpu.memory_space<vmem>>, %arg5: memref<2x128x512xbf16, #tpu.memory_space<vmem>>, %arg6: memref<128x512xbf16, #tpu.memory_space<vmem>>, %arg7: memref<2x4x16x512xbf16, #tpu.memory_space<vmem>>) attributes {dimension_semantics = [#tpu.dimension_semantics<parallel>, #tpu.dimension_semantics<parallel>, #tpu.dimension_semantics<parallel>, #tpu.dimension_semantics<parallel>], iteration_bounds = array<i64: 1, 1, 1, 1>, scalar_prefetch = 0 : i64, scratch_operands = 0 : i64, tpu.core_type = #tpu.core_type<tc>, window_params = [{transform_indices = @transform_0, window_bounds = array<i64: 2, 16, 128>}, {transform_indices = @transform_1, window_bounds = array<i64: 2, 128, 512>}, {transform_indices = @transform_2, window_bounds = array<i64: 128, 512>}, {transform_indices = @transform_3, window_bounds = array<i64: 2, 4, 16, 512>}]} {
    %c0 = arith.constant 0 : index
    %c0_0 = arith.constant 0 : index
    %0 = vector.load %arg6[%c0, %c0_0] : memref<128x512xbf16, #tpu.memory_space<vmem>>, vector<128x512xbf16>
    %c0_1 = arith.constant 0 : index
    %c0_2 = arith.constant 0 : index
    %c0_3 = arith.constant 0 : index
    %1 = vector.load %arg4[%c0_1, %c0_2, %c0_3] : memref<2x16x128xbf16, #tpu.memory_space<vmem>>, vector<1x16x128xbf16>
    %2 = vector.shape_cast %1 : vector<1x16x128xbf16> to vector<16x128xbf16>
    %c0_4 = arith.constant 0 : index
    %c0_5 = arith.constant 0 : index
    %c0_6 = arith.constant 0 : index
    %3 = vector.load %arg5[%c0_4, %c0_5, %c0_6] : memref<2x128x512xbf16, #tpu.memory_space<vmem>>, vector<1x128x512xbf16>
    %4 = vector.shape_cast %3 : vector<1x128x512xbf16> to vector<128x512xbf16>
    %cst = arith.constant dense<0.000000e+00> : vector<16x512xf32>
    %5 = tpu.matmul %2, %0, %cst {dimension_numbers = #tpu.dot_dimension_numbers<[1], [0], [0], [1], [0, 0, 1, 1], [], []>} : vector<16x128xbf16>, vector<128x512xbf16>, vector<16x512xf32> -> vector<16x512xf32>
    %6 = arith.truncf %5 : vector<16x512xf32> to vector<16x512xbf16>
    %7 = vector.extract_strided_slice %6 {offsets = [0, 0], sizes = [16, 128], strides = [1, 1]} : vector<16x512xbf16> to vector<16x128xbf16>
    %cst_7 = arith.constant dense<0.000000e+00> : vector<16x512xf32>
    %8 = tpu.matmul %7, %4, %cst_7 {dimension_numbers = #tpu.dot_dimension_numbers<[1], [0], [0], [1], [0, 0, 1, 1], [], []>} : vector<16x128xbf16>, vector<128x512xbf16>, vector<16x512xf32> -> vector<16x512xf32>
    %cst_8 = arith.constant 0.000000e+00 : f32
    %9 = vector.broadcast %cst_8 : f32 to vector<16x512xf32>
    %10 = arith.maximumf %8, %9 : vector<16x512xf32>
    %11 = arith.truncf %10 : vector<16x512xf32> to vector<16x512xbf16>
    %c0_9 = arith.constant 0 : index
    %c0_10 = arith.constant 0 : index
    %c0_11 = arith.constant 0 : index
    %c0_12 = arith.constant 0 : index
    %12 = vector.load %arg7[%c0_9, %c0_10, %c0_11, %c0_12] : memref<2x4x16x512xbf16, #tpu.memory_space<vmem>>, vector<1x1x16x512xbf16>
    %13 = vector.shape_cast %12 : vector<1x1x16x512xbf16> to vector<16x512xbf16>
    %14 = vector.shape_cast %11 : vector<16x512xbf16> to vector<1x1x16x512xbf16>
    tpu.vector_store %arg7[%c0_9, %c0_10, %c0_11, %c0_12], %14 {strides = array<i32>} : memref<2x4x16x512xbf16, #tpu.memory_space<vmem>>, vector<1x1x16x512xbf16>,
    %15 = vector.extract_strided_slice %6 {offsets = [0, 128], sizes = [16, 128], strides = [1, 1]} : vector<16x512xbf16> to vector<16x128xbf16>
    %cst_13 = arith.constant dense<0.000000e+00> : vector<16x512xf32>
    %16 = tpu.matmul %15, %4, %cst_13 {dimension_numbers = #tpu.dot_dimension_numbers<[1], [0], [0], [1], [0, 0, 1, 1], [], []>} : vector<16x128xbf16>, vector<128x512xbf16>, vector<16x512xf32> -> vector<16x512xf32>
    %cst_14 = arith.constant 0.000000e+00 : f32
    %17 = vector.broadcast %cst_14 : f32 to vector<16x512xf32>
    %18 = arith.maximumf %16, %17 : vector<16x512xf32>
    %19 = arith.truncf %18 : vector<16x512xf32> to vector<16x512xbf16>
    %c0_15 = arith.constant 0 : index
    %c1 = arith.constant 1 : index
    %c0_16 = arith.constant 0 : index
    %c0_17 = arith.constant 0 : index
    %20 = vector.load %arg7[%c0_15, %c1, %c0_16, %c0_17] : memref<2x4x16x512xbf16, #tpu.memory_space<vmem>>, vector<1x1x16x512xbf16>
    %21 = vector.shape_cast %20 : vector<1x1x16x512xbf16> to vector<16x512xbf16>
    %22 = vector.shape_cast %19 : vector<16x512xbf16> to vector<1x1x16x512xbf16>
    tpu.vector_store %arg7[%c0_15, %c1, %c0_16, %c0_17], %22 {strides = array<i32>} : memref<2x4x16x512xbf16, #tpu.memory_space<vmem>>, vector<1x1x16x512xbf16>,
    %23 = vector.extract_strided_slice %6 {offsets = [0, 256], sizes = [16, 128], strides = [1, 1]} : vector<16x512xbf16> to vector<16x128xbf16>
    %cst_18 = arith.constant dense<0.000000e+00> : vector<16x512xf32>
    %24 = tpu.matmul %23, %4, %cst_18 {dimension_numbers = #tpu.dot_dimension_numbers<[1], [0], [0], [1], [0, 0, 1, 1], [], []>} : vector<16x128xbf16>, vector<128x512xbf16>, vector<16x512xf32> -> vector<16x512xf32>
    %cst_19 = arith.constant 0.000000e+00 : f32
    %25 = vector.broadcast %cst_19 : f32 to vector<16x512xf32>
    %26 = arith.maximumf %24, %25 : vector<16x512xf32>
    %27 = arith.truncf %26 : vector<16x512xf32> to vector<16x512xbf16>
    %c0_20 = arith.constant 0 : index
    %c2 = arith.constant 2 : index
    %c0_21 = arith.constant 0 : index
    %c0_22 = arith.constant 0 : index
    %28 = vector.load %arg7[%c0_20, %c2, %c0_21, %c0_22] : memref<2x4x16x512xbf16, #tpu.memory_space<vmem>>, vector<1x1x16x512xbf16>
    %29 = vector.shape_cast %28 : vector<1x1x16x512xbf16> to vector<16x512xbf16>
    %30 = vector.shape_cast %27 : vector<16x512xbf16> to vector<1x1x16x512xbf16>
    tpu.vector_store %arg7[%c0_20, %c2, %c0_21, %c0_22], %30 {strides = array<i32>} : memref<2x4x16x512xbf16, #tpu.memory_space<vmem>>, vector<1x1x16x512xbf16>,
    %31 = vector.extract_strided_slice %6 {offsets = [0, 384], sizes = [16, 128], strides = [1, 1]} : vector<16x512xbf16> to vector<16x128xbf16>
    %cst_23 = arith.constant dense<0.000000e+00> : vector<16x512xf32>
    %32 = tpu.matmul %31, %4, %cst_23 {dimension_numbers = #tpu.dot_dimension_numbers<[1], [0], [0], [1], [0, 0, 1, 1], [], []>} : vector<16x128xbf16>, vector<128x512xbf16>, vector<16x512xf32> -> vector<16x512xf32>
    %cst_24 = arith.constant 0.000000e+00 : f32
    %33 = vector.broadcast %cst_24 : f32 to vector<16x512xf32>
    %34 = arith.maximumf %32, %33 : vector<16x512xf32>
    %35 = arith.truncf %34 : vector<16x512xf32> to vector<16x512xbf16>
    %c0_25 = arith.constant 0 : index
    %c3 = arith.constant 3 : index
    %c0_26 = arith.constant 0 : index
    %c0_27 = arith.constant 0 : index
    %36 = vector.load %arg7[%c0_25, %c3, %c0_26, %c0_27] : memref<2x4x16x512xbf16, #tpu.memory_space<vmem>>, vector<1x1x16x512xbf16>
    %37 = vector.shape_cast %36 : vector<1x1x16x512xbf16> to vector<16x512xbf16>
    %38 = vector.shape_cast %35 : vector<16x512xbf16> to vector<1x1x16x512xbf16>
    tpu.vector_store %arg7[%c0_25, %c3, %c0_26, %c0_27], %38 {strides = array<i32>} : memref<2x4x16x512xbf16, #tpu.memory_space<vmem>>, vector<1x1x16x512xbf16>,
    %c1_28 = arith.constant 1 : index
    %c0_29 = arith.constant 0 : index
    %c0_30 = arith.constant 0 : index
    %39 = vector.load %arg4[%c1_28, %c0_29, %c0_30] : memref<2x16x128xbf16, #tpu.memory_space<vmem>>, vector<1x16x128xbf16>
    %40 = vector.shape_cast %39 : vector<1x16x128xbf16> to vector<16x128xbf16>
    %c1_31 = arith.constant 1 : index
    %c0_32 = arith.constant 0 : index
    %c0_33 = arith.constant 0 : index
    %41 = vector.load %arg5[%c1_31, %c0_32, %c0_33] : memref<2x128x512xbf16, #tpu.memory_space<vmem>>, vector<1x128x512xbf16>
    %42 = vector.shape_cast %41 : vector<1x128x512xbf16> to vector<128x512xbf16>
    %cst_34 = arith.constant dense<0.000000e+00> : vector<16x512xf32>
    %43 = tpu.matmul %40, %0, %cst_34 {dimension_numbers = #tpu.dot_dimension_numbers<[1], [0], [0], [1], [0, 0, 1, 1], [], []>} : vector<16x128xbf16>, vector<128x512xbf16>, vector<16x512xf32> -> vector<16x512xf32>
    %44 = arith.truncf %43 : vector<16x512xf32> to vector<16x512xbf16>
    %45 = vector.extract_strided_slice %44 {offsets = [0, 0], sizes = [16, 128], strides = [1, 1]} : vector<16x512xbf16> to vector<16x128xbf16>
    %cst_35 = arith.constant dense<0.000000e+00> : vector<16x512xf32>
    %46 = tpu.matmul %45, %42, %cst_35 {dimension_numbers = #tpu.dot_dimension_numbers<[1], [0], [0], [1], [0, 0, 1, 1], [], []>} : vector<16x128xbf16>, vector<128x512xbf16>, vector<16x512xf32> -> vector<16x512xf32>
    %cst_36 = arith.constant 0.000000e+00 : f32
    %47 = vector.broadcast %cst_36 : f32 to vector<16x512xf32>
    %48 = arith.maximumf %46, %47 : vector<16x512xf32>
    %49 = arith.truncf %48 : vector<16x512xf32> to vector<16x512xbf16>
    %c1_37 = arith.constant 1 : index
    %c0_38 = arith.constant 0 : index
    %c0_39 = arith.constant 0 : index
    %c0_40 = arith.constant 0 : index
    %50 = vector.load %arg7[%c1_37, %c0_38, %c0_39, %c0_40] : memref<2x4x16x512xbf16, #tpu.memory_space<vmem>>, vector<1x1x16x512xbf16>
    %51 = vector.shape_cast %50 : vector<1x1x16x512xbf16> to vector<16x512xbf16>
    %52 = vector.shape_cast %49 : vector<16x512xbf16> to vector<1x1x16x512xbf16>
    tpu.vector_store %arg7[%c1_37, %c0_38, %c0_39, %c0_40], %52 {strides = array<i32>} : memref<2x4x16x512xbf16, #tpu.memory_space<vmem>>, vector<1x1x16x512xbf16>,
    %53 = vector.extract_strided_slice %44 {offsets = [0, 128], sizes = [16, 128], strides = [1, 1]} : vector<16x512xbf16> to vector<16x128xbf16>
    %cst_41 = arith.constant dense<0.000000e+00> : vector<16x512xf32>
    %54 = tpu.matmul %53, %42, %cst_41 {dimension_numbers = #tpu.dot_dimension_numbers<[1], [0], [0], [1], [0, 0, 1, 1], [], []>} : vector<16x128xbf16>, vector<128x512xbf16>, vector<16x512xf32> -> vector<16x512xf32>
    %cst_42 = arith.constant 0.000000e+00 : f32
    %55 = vector.broadcast %cst_42 : f32 to vector<16x512xf32>
    %56 = arith.maximumf %54, %55 : vector<16x512xf32>
    %57 = arith.truncf %56 : vector<16x512xf32> to vector<16x512xbf16>
    %c1_43 = arith.constant 1 : index
    %c1_44 = arith.constant 1 : index
    %c0_45 = arith.constant 0 : index
    %c0_46 = arith.constant 0 : index
    %58 = vector.load %arg7[%c1_43, %c1_44, %c0_45, %c0_46] : memref<2x4x16x512xbf16, #tpu.memory_space<vmem>>, vector<1x1x16x512xbf16>
    %59 = vector.shape_cast %58 : vector<1x1x16x512xbf16> to vector<16x512xbf16>
    %60 = vector.shape_cast %57 : vector<16x512xbf16> to vector<1x1x16x512xbf16>
    tpu.vector_store %arg7[%c1_43, %c1_44, %c0_45, %c0_46], %60 {strides = array<i32>} : memref<2x4x16x512xbf16, #tpu.memory_space<vmem>>, vector<1x1x16x512xbf16>,
    %61 = vector.extract_strided_slice %44 {offsets = [0, 256], sizes = [16, 128], strides = [1, 1]} : vector<16x512xbf16> to vector<16x128xbf16>
    %cst_47 = arith.constant dense<0.000000e+00> : vector<16x512xf32>
    %62 = tpu.matmul %61, %42, %cst_47 {dimension_numbers = #tpu.dot_dimension_numbers<[1], [0], [0], [1], [0, 0, 1, 1], [], []>} : vector<16x128xbf16>, vector<128x512xbf16>, vector<16x512xf32> -> vector<16x512xf32>
    %cst_48 = arith.constant 0.000000e+00 : f32
    %63 = vector.broadcast %cst_48 : f32 to vector<16x512xf32>
    %64 = arith.maximumf %62, %63 : vector<16x512xf32>
    %65 = arith.truncf %64 : vector<16x512xf32> to vector<16x512xbf16>
    %c1_49 = arith.constant 1 : index
    %c2_50 = arith.constant 2 : index
    %c0_51 = arith.constant 0 : index
    %c0_52 = arith.constant 0 : index
    %66 = vector.load %arg7[%c1_49, %c2_50, %c0_51, %c0_52] : memref<2x4x16x512xbf16, #tpu.memory_space<vmem>>, vector<1x1x16x512xbf16>
    %67 = vector.shape_cast %66 : vector<1x1x16x512xbf16> to vector<16x512xbf16>
    %68 = vector.shape_cast %65 : vector<16x512xbf16> to vector<1x1x16x512xbf16>
    tpu.vector_store %arg7[%c1_49, %c2_50, %c0_51, %c0_52], %68 {strides = array<i32>} : memref<2x4x16x512xbf16, #tpu.memory_space<vmem>>, vector<1x1x16x512xbf16>,
    %69 = vector.extract_strided_slice %44 {offsets = [0, 384], sizes = [16, 128], strides = [1, 1]} : vector<16x512xbf16> to vector<16x128xbf16>
    %cst_53 = arith.constant dense<0.000000e+00> : vector<16x512xf32>
    %70 = tpu.matmul %69, %42, %cst_53 {dimension_numbers = #tpu.dot_dimension_numbers<[1], [0], [0], [1], [0, 0, 1, 1], [], []>} : vector<16x128xbf16>, vector<128x512xbf16>, vector<16x512xf32> -> vector<16x512xf32>
    %cst_54 = arith.constant 0.000000e+00 : f32
    %71 = vector.broadcast %cst_54 : f32 to vector<16x512xf32>
    %72 = arith.maximumf %70, %71 : vector<16x512xf32>
    %73 = arith.truncf %72 : vector<16x512xf32> to vector<16x512xbf16>
    %c1_55 = arith.constant 1 : index
    %c3_56 = arith.constant 3 : index
    %c0_57 = arith.constant 0 : index
    %c0_58 = arith.constant 0 : index
    %74 = vector.load %arg7[%c1_55, %c3_56, %c0_57, %c0_58] : memref<2x4x16x512xbf16, #tpu.memory_space<vmem>>, vector<1x1x16x512xbf16>
    %75 = vector.shape_cast %74 : vector<1x1x16x512xbf16> to vector<16x512xbf16>
    %76 = vector.shape_cast %73 : vector<16x512xbf16> to vector<1x1x16x512xbf16>
    tpu.vector_store %arg7[%c1_55, %c3_56, %c0_57, %c0_58], %76 {strides = array<i32>} : memref<2x4x16x512xbf16, #tpu.memory_space<vmem>>, vector<1x1x16x512xbf16>,
    return
  }
  func.func @transform_0(%arg0: i32, %arg1: i32, %arg2: i32, %arg3: i32) -> (i32, i32, i32) {
    %c0_i32 = arith.constant 0 : i32
    %c0_i32_0 = arith.constant 0 : i32
    return %arg0, %arg2, %c0_i32 : i32, i32, i32
  }
  func.func @transform_1(%arg0: i32, %arg1: i32, %arg2: i32, %arg3: i32) -> (i32, i32, i32) {
    %c0_i32 = arith.constant 0 : i32
    %c0_i32_0 = arith.constant 0 : i32
    return %arg0, %c0_i32, %arg3 : i32, i32, i32
  }
  func.func @transform_2(%arg0: i32, %arg1: i32, %arg2: i32, %arg3: i32) -> (i32, i32) {
    %c0_i32 = arith.constant 0 : i32
    %c0_i32_0 = arith.constant 0 : i32
    return %c0_i32, %arg1 : i32, i32
  }
  func.func @transform_3(%arg0: i32, %arg1: i32, %arg2: i32, %arg3: i32) -> (i32, i32, i32, i32) {
    %c0_i32 = arith.constant 0 : i32
    return %arg0, %arg1, %arg2, %arg3 : i32, i32, i32, i32
  }
}

</mosaic_0001>

<llo_original>
// kernel: tpu_custom_call.1
$region0: #{tpu_custom_call.1}
  #allocation0 [shape = 'u32[]', space=smem, size = 0x4, offset = 0x4, fixed_abs, tag = 'smem constant byte address 0x4 - core index']
  #allocation1 [shape = 'u32[144,128]{1,0:T(1,128)}', space=vmem, size = 0x12000, scoped, tag = 'internal scratch']
  %s0 = inlined_call_operand.hbm [shape: bf16[2,16,128], index: 0, kind: input, shape index: {}]
  %s1 = inlined_call_operand.hbm [shape: bf16[2,128,512], index: 1, kind: input, shape index: {}]
  %s2 = inlined_call_operand.hbm [shape: bf16[128,512], index: 2, kind: input, shape index: {}]
  %s3 = inlined_call_operand.hbm [shape: bf16[2,4,16,512], index: 3, kind: output, shape index: {}]
  %s4 = sld [smem:[#allocation0]]
  $region34: #{tpu_custom_call.1} parent=0
    _
  %s6 = ssub.s32 1, %s4
  %s7 = scalar_select 0, %s6, %s4
  $region1: #{tpu_custom_call.1} parent=0
    #allocation2 [shape = 'u8[8192]{0}', space=vmem, size = 0x2000, scoped, tag = 'input window, operand 0, single buffered']
    #allocation3 [shape = 's32[1]{0}', space=sflag, size = 0x4, scoped, tag = 'scoped memory for tpu_custom_call.1']
    #allocation4 [shape = 's32[1]{0}', space=sflag, size = 0x4, scoped, tag = 'scoped memory for tpu_custom_call.1']
    #allocation5 [shape = 'u8[262144]{0}', space=vmem, size = 0x40000, scoped, tag = 'input window, operand 1, single buffered']
    #allocation6 [shape = 's32[1]{0}', space=sflag, size = 0x4, scoped, tag = 'scoped memory for tpu_custom_call.1']
    #allocation7 [shape = 'u8[131072]{0}', space=vmem, size = 0x20000, scoped, tag = 'input window, operand 2, single buffered']
    #allocation8 [shape = 'u8[131072]{0}', space=vmem, size = 0x20000, scoped, tag = 'output window, operand 0, single buffered']
    %8 = vsyncpa [#allocation3], 0
    %9 = vsyncpa [#allocation6], 0
    %10 = vsyncpa [#allocation4], 0
    // Predicated region
    $region2: #{tpu_custom_call.1} parent=1 // pred_check
      _
    $region3: #{tpu_custom_call.1} parent=1 // pred_check_branch
      %12 = sbr.rel (0) target = $region5
    $region4: #{tpu_custom_call.1} parent=1 // pred_region
      %s14 = ssub.s32 256, 256
      %15 = vsyncadd [#allocation3], %s14
      %s16 = sshll.u32 [#allocation2], 4
      %s17 = int_to_ptr.vmem [resolvable:$true] %s16
      %22 = dma.hbm_to_vmem [thread:$0]  %s0, 256, %s17, [#allocation3], 64, 64, 4
    $region5: #{tpu_custom_call.1} parent=1 // pred_fallthru
      _
    // Predicated region
    $region6: #{tpu_custom_call.1} parent=1 // pred_check
      _
    $region7: #{tpu_custom_call.1} parent=1 // pred_check_branch
      %24 = sbr.rel (0) target = $region9
    $region8: #{tpu_custom_call.1} parent=1 // pred_region
      %s26 = ssub.s32 8192, 8192
      %27 = vsyncadd [#allocation6], %s26
      %s28 = sshll.u32 [#allocation5], 4
      %s29 = int_to_ptr.vmem [resolvable:$true] %s28
      %34 = dma.hbm_to_vmem [thread:$0]  %s1, 8192, %s29, [#allocation6], 256, 256, 16
    $region9: #{tpu_custom_call.1} parent=1 // pred_fallthru
      _
    // Predicated region
    $region10: #{tpu_custom_call.1} parent=1 // pred_check
      _
    $region11: #{tpu_custom_call.1} parent=1 // pred_check_branch
      %36 = sbr.rel (0) target = $region13
    $region12: #{tpu_custom_call.1} parent=1 // pred_region
      %s38 = ssub.s32 4096, 4096
      %39 = vsyncadd [#allocation6], %s38
      %s40 = sshll.u32 [#allocation7], 4
      %s41 = int_to_ptr.vmem [resolvable:$true] %s40
      %46 = dma.hbm_to_vmem [thread:$0]  %s2, 4096, %s41, [#allocation6], 256, 256, 16
    $region13: #{tpu_custom_call.1} parent=1 // pred_fallthru
      _
    // Predicated region
    $region14: #{tpu_custom_call.1} parent=1 // pred_check
      _
    $region15: #{tpu_custom_call.1} parent=1 // pred_check_branch
      %48 = sbr.rel (0) target = $region17
    $region16: #{tpu_custom_call.1} parent=1 // pred_region
      %49 = dma.done [#allocation3], 256
    $region17: #{tpu_custom_call.1} parent=1 // pred_fallthru
      _
    // Predicated region
    $region18: #{tpu_custom_call.1} parent=1 // pred_check
      _
    $region19: #{tpu_custom_call.1} parent=1 // pred_check_branch
      %51 = sbr.rel (0) target = $region21
    $region20: #{tpu_custom_call.1} parent=1 // pred_region
      %52 = dma.done [#allocation6], 8192
    $region21: #{tpu_custom_call.1} parent=1 // pred_fallthru
      _
    // Predicated region
    $region22: #{tpu_custom_call.1} parent=1 // pred_check
      _
    $region23: #{tpu_custom_call.1} parent=1 // pred_check_branch
      %54 = sbr.rel (0) target = $region25
    $region24: #{tpu_custom_call.1} parent=1 // pred_region
      %55 = dma.done [#allocation6], 4096
    $region25: #{tpu_custom_call.1} parent=1 // pred_fallthru
      _
    %v57 = vld [vmem:[#allocation7] sm:$0xff]
    %v58 = vld [vmem:[#allocation7 + $0x8] sm:$0xff]
    %v59 = vld [vmem:[#allocation7 + $0x10] sm:$0xff]
    %v60 = vld [vmem:[#allocation7 + $0x18] sm:$0xff]
    %v61 = vld [vmem:[#allocation7 + $0x20] sm:$0xff]
    %v62 = vld [vmem:[#allocation7 + $0x28] sm:$0xff]
    %v63 = vld [vmem:[#allocation7 + $0x30] sm:$0xff]
    %v64 = vld [vmem:[#allocation7 + $0x38] sm:$0xff]
    %v65 = vld [vmem:[#allocation7 + $0x40] sm:$0xff]
    %v66 = vld [vmem:[#allocation7 + $0x48] sm:$0xff]
    %v67 = vld [vmem:[#allocation7 + $0x50] sm:$0xff]
    %v68 = vld [vmem:[#allocation7 + $0x58] sm:$0xff]
    %v69 = vld [vmem:[#allocation7 + $0x60] sm:$0xff]
    %v70 = vld [vmem:[#allocation7 + $0x68] sm:$0xff]
    %v71 = vld [vmem:[#allocation7 + $0x70] sm:$0xff]
    %v72 = vld [vmem:[#allocation7 + $0x78] sm:$0xff]
    %v73 = vld [vmem:[#allocation7 + $0x80] sm:$0xff]
    %v74 = vld [vmem:[#allocation7 + $0x88] sm:$0xff]
    %v75 = vld [vmem:[#allocation7 + $0x90] sm:$0xff]
    %v76 = vld [vmem:[#allocation7 + $0x98] sm:$0xff]
    %v77 = vld [vmem:[#allocation7 + $0xa0] sm:$0xff]
    %v78 = vld [vmem:[#allocation7 + $0xa8] sm:$0xff]
    %v79 = vld [vmem:[#allocation7 + $0xb0] sm:$0xff]
    %v80 = vld [vmem:[#allocation7 + $0xb8] sm:$0xff]
    %v81 = vld [vmem:[#allocation7 + $0xc0] sm:$0xff]
    %v82 = vld [vmem:[#allocation7 + $0xc8] sm:$0xff]
    %v83 = vld [vmem:[#allocation7 + $0xd0] sm:$0xff]
    %v84 = vld [vmem:[#allocation7 + $0xd8] sm:$0xff]
    %v85 = vld [vmem:[#allocation7 + $0xe0] sm:$0xff]
    %v86 = vld [vmem:[#allocation7 + $0xe8] sm:$0xff]
    %v87 = vld [vmem:[#allocation7 + $0xf0] sm:$0xff]
    %v88 = vld [vmem:[#allocation7 + $0xf8] sm:$0xff]
    %v89 = vld [vmem:[#allocation2] sm:$0xf]
    %v90 = vld [vmem:[#allocation2 + $0x4] sm:$0xf]
    %v91 = vld [vmem:[#allocation5] sm:$0xff]
    %v92 = vld [vmem:[#allocation5 + $0x8] sm:$0xff]
    %v93 = vld [vmem:[#allocation5 + $0x10] sm:$0xff]
    %v94 = vld [vmem:[#allocation5 + $0x18] sm:$0xff]
    %v95 = vld [vmem:[#allocation5 + $0x20] sm:$0xff]
    %v96 = vld [vmem:[#allocation5 + $0x28] sm:$0xff]
    %v97 = vld [vmem:[#allocation5 + $0x30] sm:$0xff]
    %v98 = vld [vmem:[#allocation5 + $0x38] sm:$0xff]
    %v99 = vld [vmem:[#allocation5 + $0x40] sm:$0xff]
    %v100 = vld [vmem:[#allocation5 + $0x48] sm:$0xff]
    %v101 = vld [vmem:[#allocation5 + $0x50] sm:$0xff]
    %v102 = vld [vmem:[#allocation5 + $0x58] sm:$0xff]
    %v103 = vld [vmem:[#allocation5 + $0x60] sm:$0xff]
    %v104 = vld [vmem:[#allocation5 + $0x68] sm:$0xff]
    %v105 = vld [vmem:[#allocation5 + $0x70] sm:$0xff]
    %v106 = vld [vmem:[#allocation5 + $0x78] sm:$0xff]
    %v107 = vld [vmem:[#allocation5 + $0x80] sm:$0xff]
    %v108 = vld [vmem:[#allocation5 + $0x88] sm:$0xff]
    %v109 = vld [vmem:[#allocation5 + $0x90] sm:$0xff]
    %v110 = vld [vmem:[#allocation5 + $0x98] sm:$0xff]
    %v111 = vld [vmem:[#allocation5 + $0xa0] sm:$0xff]
    %v112 = vld [vmem:[#allocation5 + $0xa8] sm:$0xff]
    %v113 = vld [vmem:[#allocation5 + $0xb0] sm:$0xff]
    %v114 = vld [vmem:[#allocation5 + $0xb8] sm:$0xff]
    %v115 = vld [vmem:[#allocation5 + $0xc0] sm:$0xff]
    %v116 = vld [vmem:[#allocation5 + $0xc8] sm:$0xff]
    %v117 = vld [vmem:[#allocation5 + $0xd0] sm:$0xff]
    %v118 = vld [vmem:[#allocation5 + $0xd8] sm:$0xff]
    %v119 = vld [vmem:[#allocation5 + $0xe0] sm:$0xff]
    %v120 = vld [vmem:[#allocation5 + $0xe8] sm:$0xff]
    %v121 = vld [vmem:[#allocation5 + $0xf0] sm:$0xff]
    %v122 = vld [vmem:[#allocation5 + $0xf8] sm:$0xff]
    %v125 = vunpack.c.l.b16 %v89
    %v126 = vunpack.c.l.b16 %v90
    %v127 = vpack.c.b16 %v126, %v125
    %v161 = vunpack.c.l.b16 %v57
    %v162 = vunpack.c.h.b16 %v57
    %v163 = vunpack.c.l.b16 %v58
    %v164 = vunpack.c.h.b16 %v58
    %v165 = vunpack.c.l.b16 %v59
    %v166 = vunpack.c.h.b16 %v59
    %v167 = vunpack.c.l.b16 %v60
    %v168 = vunpack.c.h.b16 %v60
    %v169 = vunpack.c.l.b16 %v61
    %v170 = vunpack.c.h.b16 %v61
    %v171 = vunpack.c.l.b16 %v62
    %v172 = vunpack.c.h.b16 %v62
    %v173 = vunpack.c.l.b16 %v63
    %v174 = vunpack.c.h.b16 %v63
    %v175 = vunpack.c.l.b16 %v64
    %v176 = vunpack.c.h.b16 %v64
    %v177 = vunpack.c.l.b16 %v65
    %v178 = vunpack.c.h.b16 %v65
    %v179 = vunpack.c.l.b16 %v66
    %v180 = vunpack.c.h.b16 %v66
    %v181 = vunpack.c.l.b16 %v67
    %v182 = vunpack.c.h.b16 %v67
    %v183 = vunpack.c.l.b16 %v68
    %v184 = vunpack.c.h.b16 %v68
    %v185 = vunpack.c.l.b16 %v69
    %v186 = vunpack.c.h.b16 %v69
    %v187 = vunpack.c.l.b16 %v70
    %v188 = vunpack.c.h.b16 %v70
    %v189 = vunpack.c.l.b16 %v71
    %v190 = vunpack.c.h.b16 %v71
    %v191 = vunpack.c.l.b16 %v72
    %v192 = vunpack.c.h.b16 %v72
    %v193 = vunpack.c.l.b16 %v73
    %v194 = vunpack.c.h.b16 %v73
    %v195 = vunpack.c.l.b16 %v74
    %v196 = vunpack.c.h.b16 %v74
    %v197 = vunpack.c.l.b16 %v75
    %v198 = vunpack.c.h.b16 %v75
    %v199 = vunpack.c.l.b16 %v76
    %v200 = vunpack.c.h.b16 %v76
    %v201 = vunpack.c.l.b16 %v77
    %v202 = vunpack.c.h.b16 %v77
    %v203 = vunpack.c.l.b16 %v78
    %v204 = vunpack.c.h.b16 %v78
    %v205 = vunpack.c.l.b16 %v79
    %v206 = vunpack.c.h.b16 %v79
    %v207 = vunpack.c.l.b16 %v80
    %v208 = vunpack.c.h.b16 %v80
    %v209 = vunpack.c.l.b16 %v81
    %v210 = vunpack.c.h.b16 %v81
    %v211 = vunpack.c.l.b16 %v82
    %v212 = vunpack.c.h.b16 %v82
    %v213 = vunpack.c.l.b16 %v83
    %v214 = vunpack.c.h.b16 %v83
    %v215 = vunpack.c.l.b16 %v84
    %v216 = vunpack.c.h.b16 %v84
    %v217 = vunpack.c.l.b16 %v85
    %v218 = vunpack.c.h.b16 %v85
    %v219 = vunpack.c.l.b16 %v86
    %v220 = vunpack.c.h.b16 %v86
    %v221 = vunpack.c.l.b16 %v87
    %v222 = vunpack.c.h.b16 %v87
    %v223 = vunpack.c.l.b16 %v88
    %v224 = vunpack.c.h.b16 %v88
    %v225 = vpack.c.b16 %v165, %v161
    %v226 = vpack.c.b16 %v166, %v162
    %v227 = vpack.c.b16 %v167, %v163
    %v228 = vpack.c.b16 %v168, %v164
    %v229 = vpack.c.b16 %v173, %v169
    %v230 = vpack.c.b16 %v174, %v170
    %v231 = vpack.c.b16 %v175, %v171
    %v232 = vpack.c.b16 %v176, %v172
    %v233 = vpack.c.b16 %v181, %v177
    %v234 = vpack.c.b16 %v182, %v178
    %v235 = vpack.c.b16 %v183, %v179
    %v236 = vpack.c.b16 %v184, %v180
    %v237 = vpack.c.b16 %v189, %v185
    %v238 = vpack.c.b16 %v190, %v186
    %v239 = vpack.c.b16 %v191, %v187
    %v240 = vpack.c.b16 %v192, %v188
    %v241 = vpack.c.b16 %v197, %v193
    %v242 = vpack.c.b16 %v198, %v194
    %v243 = vpack.c.b16 %v199, %v195
    %v244 = vpack.c.b16 %v200, %v196
    %v245 = vpack.c.b16 %v205, %v201
    %v246 = vpack.c.b16 %v206, %v202
    %v247 = vpack.c.b16 %v207, %v203
    %v248 = vpack.c.b16 %v208, %v204
    %v249 = vpack.c.b16 %v213, %v209
    %v250 = vpack.c.b16 %v214, %v210
    %v251 = vpack.c.b16 %v215, %v211
    %v252 = vpack.c.b16 %v216, %v212
    %v253 = vpack.c.b16 %v221, %v217
    %v254 = vpack.c.b16 %v222, %v218
    %v255 = vpack.c.b16 %v223, %v219
    %v256 = vpack.c.b16 %v224, %v220
    %289 = vmatprep.subr.bf16.mxu0 %v226
    %290 = vmatpush1.bf16.msra.mxu0 %v225
    %291 = vmatprep.subr.bf16.mxu0 %v230
    %292 = vmatpush1.bf16.msra.mxu0 %v229
    %293 = vmatprep.subr.bf16.mxu0 %v234
    %294 = vmatpush1.bf16.msra.mxu0 %v233
    %295 = vmatprep.subr.bf16.mxu0 %v238
    %296 = vmatpush1.bf16.msra.mxu0 %v237
    %297 = vmatprep.subr.bf16.mxu0 %v242
    %298 = vmatpush1.bf16.msra.mxu0 %v241
    %299 = vmatprep.subr.bf16.mxu0 %v246
    %300 = vmatpush1.bf16.msra.mxu0 %v245
    %301 = vmatprep.subr.bf16.mxu0 %v250
    %302 = vmatpush1.bf16.msra.mxu0 %v249
    %303 = vmatprep.subr.bf16.mxu0 %v254
    %304 = vmatpush1.bf16.msra.mxu0 %v253
    %305 = vmatprep.subr.bf16.mxu0 0
    %306 = vmatpush1.bf16.msra.mxu0 0
    %307 = vmatprep.subr.bf16.mxu0 0
    %308 = vmatpush1.bf16.msra.mxu0 0
    %309 = vmatprep.subr.bf16.mxu0 0
    %310 = vmatpush1.bf16.msra.mxu0 0
    %311 = vmatprep.subr.bf16.mxu0 0
    %312 = vmatpush1.bf16.msra.mxu0 0
    %313 = vmatprep.subr.bf16.mxu0 0
    %314 = vmatpush1.bf16.msra.mxu0 0
    %315 = vmatprep.subr.bf16.mxu0 0
    %316 = vmatpush1.bf16.msra.mxu0 0
    %317 = vmatprep.subr.bf16.mxu0 0
    %318 = vmatpush1.bf16.msra.mxu0 0
    %319 = vmatprep.subr.bf16.mxu0 0
    %320 = vmatpush1.bf16.msra.mxu0 0
    %321 = vmatprep.mubr.bf16.mxu0 0
    %322 = vmatmul.mubr.bf16.gmra.mrb[0].mxu0 %v127
    %v323 = vpop.f32.mrb[0].mxu0
    %v324 = vadd.f32 0.0, %v323
    %v325 = vpop.f32.mrb[0].mxu0
    %v326 = vadd.f32 0.0, %v325
    %v327 = vpop.f32.mrb[0].mxu0
    %v328 = vadd.f32 0.0, %v327
    %v329 = vpop.f32.mrb[0].mxu0
    %v330 = vadd.f32 0.0, %v329
    %331 = vdwg.mxu0
    %332 = vmatprep.subr.bf16.mxu0 %v228
    %333 = vmatpush1.bf16.msra.mxu0 %v227
    %334 = vmatprep.subr.bf16.mxu0 %v232
    %335 = vmatpush1.bf16.msra.mxu0 %v231
    %336 = vmatprep.subr.bf16.mxu0 %v236
    %337 = vmatpush1.bf16.msra.mxu0 %v235
    %338 = vmatprep.subr.bf16.mxu0 %v240
    %339 = vmatpush1.bf16.msra.mxu0 %v239
    %340 = vmatprep.subr.bf16.mxu0 %v244
    %341 = vmatpush1.bf16.msra.mxu0 %v243
    %342 = vmatprep.subr.bf16.mxu0 %v248
    %343 = vmatpush1.bf16.msra.mxu0 %v247
    %344 = vmatprep.subr.bf16.mxu0 %v252
    %345 = vmatpush1.bf16.msra.mxu0 %v251
    %346 = vmatprep.subr.bf16.mxu0 %v256
    %347 = vmatpush1.bf16.msra.mxu0 %v255
    %348 = vmatprep.subr.bf16.mxu0 0
    %349 = vmatpush1.bf16.msra.mxu0 0
    %350 = vmatprep.subr.bf16.mxu0 0
    %351 = vmatpush1.bf16.msra.mxu0 0
    %352 = vmatprep.subr.bf16.mxu0 0
    %353 = vmatpush1.bf16.msra.mxu0 0
    %354 = vmatprep.subr.bf16.mxu0 0
    %355 = vmatpush1.bf16.msra.mxu0 0
    %356 = vmatprep.subr.bf16.mxu0 0
    %357 = vmatpush1.bf16.msra.mxu0 0
    %358 = vmatprep.subr.bf16.mxu0 0
    %359 = vmatpush1.bf16.msra.mxu0 0
    %360 = vmatprep.subr.bf16.mxu0 0
    %361 = vmatpush1.bf16.msra.mxu0 0
    %362 = vmatprep.subr.bf16.mxu0 0
    %363 = vmatpush1.bf16.msra.mxu0 0
    %364 = vmatprep.mubr.bf16.mxu0 0
    %365 = vmatmul.mubr.bf16.gmra.mrb[0].mxu0 %v127
    %v366 = vpop.f32.mrb[0].mxu0
    %v367 = vadd.f32 0.0, %v366
    %v368 = vpop.f32.mrb[0].mxu0
    %v369 = vadd.f32 0.0, %v368
    %v370 = vpop.f32.mrb[0].mxu0
    %v371 = vadd.f32 0.0, %v370
    %v372 = vpop.f32.mrb[0].mxu0
    %v373 = vadd.f32 0.0, %v372
    %374 = vdwg.mxu0
    %v375 = vpack.c.bf16 %v328, %v324
    %v376 = vpack.c.bf16 %v330, %v326
    %v377 = vpack.c.bf16 %v371, %v367
    %v378 = vpack.c.bf16 %v373, %v369
    %v411 = vunpack.c.l.b16 %v91
    %v412 = vunpack.c.h.b16 %v91
    %v413 = vunpack.c.l.b16 %v92
    %v414 = vunpack.c.h.b16 %v92
    %v415 = vunpack.c.l.b16 %v93
    %v416 = vunpack.c.h.b16 %v93
    %v417 = vunpack.c.l.b16 %v94
    %v418 = vunpack.c.h.b16 %v94
    %v419 = vunpack.c.l.b16 %v95
    %v420 = vunpack.c.h.b16 %v95
    %v421 = vunpack.c.l.b16 %v96
    %v422 = vunpack.c.h.b16 %v96
    %v423 = vunpack.c.l.b16 %v97
    %v424 = vunpack.c.h.b16 %v97
    %v425 = vunpack.c.l.b16 %v98
    %v426 = vunpack.c.h.b16 %v98
    %v427 = vunpack.c.l.b16 %v99
    %v428 = vunpack.c.h.b16 %v99
    %v429 = vunpack.c.l.b16 %v100
    %v430 = vunpack.c.h.b16 %v100
    %v431 = vunpack.c.l.b16 %v101
    %v432 = vunpack.c.h.b16 %v101
    %v433 = vunpack.c.l.b16 %v102
    %v434 = vunpack.c.h.b16 %v102
    %v435 = vunpack.c.l.b16 %v103
    %v436 = vunpack.c.h.b16 %v103
    %v437 = vunpack.c.l.b16 %v104
    %v438 = vunpack.c.h.b16 %v104
    %v439 = vunpack.c.l.b16 %v105
    %v440 = vunpack.c.h.b16 %v105
    %v441 = vunpack.c.l.b16 %v106
    %v442 = vunpack.c.h.b16 %v106
    %v443 = vunpack.c.l.b16 %v107
    %v444 = vunpack.c.h.b16 %v107
    %v445 = vunpack.c.l.b16 %v108
    %v446 = vunpack.c.h.b16 %v108
    %v447 = vunpack.c.l.b16 %v109
    %v448 = vunpack.c.h.b16 %v109
    %v449 = vunpack.c.l.b16 %v110
    %v450 = vunpack.c.h.b16 %v110
    %v451 = vunpack.c.l.b16 %v111
    %v452 = vunpack.c.h.b16 %v111
    %v453 = vunpack.c.l.b16 %v112
    %v454 = vunpack.c.h.b16 %v112
    %v455 = vunpack.c.l.b16 %v113
    %v456 = vunpack.c.h.b16 %v113
    %v457 = vunpack.c.l.b16 %v114
    %v458 = vunpack.c.h.b16 %v114
    %v459 = vunpack.c.l.b16 %v115
    %v460 = vunpack.c.h.b16 %v115
    %v461 = vunpack.c.l.b16 %v116
    %v462 = vunpack.c.h.b16 %v116
    %v463 = vunpack.c.l.b16 %v117
    %v464 = vunpack.c.h.b16 %v117
    %v465 = vunpack.c.l.b16 %v118
    %v466 = vunpack.c.h.b16 %v118
    %v467 = vunpack.c.l.b16 %v119
    %v468 = vunpack.c.h.b16 %v119
    %v469 = vunpack.c.l.b16 %v120
    %v470 = vunpack.c.h.b16 %v120
    %v471 = vunpack.c.l.b16 %v121
    %v472 = vunpack.c.h.b16 %v121
    %v473 = vunpack.c.l.b16 %v122
    %v474 = vunpack.c.h.b16 %v122
    %v475 = vpack.c.b16 %v415, %v411
    %v476 = vpack.c.b16 %v416, %v412
    %v477 = vpack.c.b16 %v417, %v413
    %v478 = vpack.c.b16 %v418, %v414
    %v479 = vpack.c.b16 %v423, %v419
    %v480 = vpack.c.b16 %v424, %v420
    %v481 = vpack.c.b16 %v425, %v421
    %v482 = vpack.c.b16 %v426, %v422
    %v483 = vpack.c.b16 %v431, %v427
    %v484 = vpack.c.b16 %v432, %v428
    %v485 = vpack.c.b16 %v433, %v429
    %v486 = vpack.c.b16 %v434, %v430
    %v487 = vpack.c.b16 %v439, %v435
    %v488 = vpack.c.b16 %v440, %v436
    %v489 = vpack.c.b16 %v441, %v437
    %v490 = vpack.c.b16 %v442, %v438
    %v491 = vpack.c.b16 %v447, %v443
    %v492 = vpack.c.b16 %v448, %v444
    %v493 = vpack.c.b16 %v449, %v445
    %v494 = vpack.c.b16 %v450, %v446
    %v495 = vpack.c.b16 %v455, %v451
    %v496 = vpack.c.b16 %v456, %v452
    %v497 = vpack.c.b16 %v457, %v453
    %v498 = vpack.c.b16 %v458, %v454
    %v499 = vpack.c.b16 %v463, %v459
    %v500 = vpack.c.b16 %v464, %v460
    %v501 = vpack.c.b16 %v465, %v461
    %v502 = vpack.c.b16 %v466, %v462
    %v503 = vpack.c.b16 %v471, %v467
    %v504 = vpack.c.b16 %v472, %v468
    %v505 = vpack.c.b16 %v473, %v469
    %v506 = vpack.c.b16 %v474, %v470
    %539 = vmatprep.subr.bf16.mxu0 %v476
    %540 = vmatpush1.bf16.msra.mxu0 %v475
    %541 = vmatprep.subr.bf16.mxu0 %v480
    %542 = vmatpush1.bf16.msra.mxu0 %v479
    %543 = vmatprep.subr.bf16.mxu0 %v484
    %544 = vmatpush1.bf16.msra.mxu0 %v483
    %545 = vmatprep.subr.bf16.mxu0 %v488
    %546 = vmatpush1.bf16.msra.mxu0 %v487
    %547 = vmatprep.subr.bf16.mxu0 %v492
    %548 = vmatpush1.bf16.msra.mxu0 %v491
    %549 = vmatprep.subr.bf16.mxu0 %v496
    %550 = vmatpush1.bf16.msra.mxu0 %v495
    %551 = vmatprep.subr.bf16.mxu0 %v500
    %552 = vmatpush1.bf16.msra.mxu0 %v499
    %553 = vmatprep.subr.bf16.mxu0 %v504
    %554 = vmatpush1.bf16.msra.mxu0 %v503
    %555 = vmatprep.subr.bf16.mxu0 0
    %556 = vmatpush1.bf16.msra.mxu0 0
    %557 = vmatprep.subr.bf16.mxu0 0
    %558 = vmatpush1.bf16.msra.mxu0 0
    %559 = vmatprep.subr.bf16.mxu0 0
    %560 = vmatpush1.bf16.msra.mxu0 0
    %561 = vmatprep.subr.bf16.mxu0 0
    %562 = vmatpush1.bf16.msra.mxu0 0
    %563 = vmatprep.subr.bf16.mxu0 0
    %564 = vmatpush1.bf16.msra.mxu0 0
    %565 = vmatprep.subr.bf16.mxu0 0
    %566 = vmatpush1.bf16.msra.mxu0 0
    %567 = vmatprep.subr.bf16.mxu0 0
    %568 = vmatpush1.bf16.msra.mxu0 0
    %569 = vmatprep.subr.bf16.mxu0 0
    %570 = vmatpush1.bf16.msra.mxu0 0
    %571 = vmatprep.mubr.bf16.mxu0 0
    %572 = vmatmul.mubr.bf16.gmra.mrb[0].mxu0 %v375
    %v573 = vpop.f32.mrb[0].mxu0
    %v574 = vadd.f32 0.0, %v573
    %v575 = vpop.f32.mrb[0].mxu0
    %v576 = vadd.f32 0.0, %v575
    %v577 = vpop.f32.mrb[0].mxu0
    %v578 = vadd.f32 0.0, %v577
    %v579 = vpop.f32.mrb[0].mxu0
    %v580 = vadd.f32 0.0, %v579
    %581 = vdwg.mxu0
    %582 = vmatprep.subr.bf16.mxu0 %v478
    %583 = vmatpush1.bf16.msra.mxu0 %v477
    %584 = vmatprep.subr.bf16.mxu0 %v482
    %585 = vmatpush1.bf16.msra.mxu0 %v481
    %586 = vmatprep.subr.bf16.mxu0 %v486
    %587 = vmatpush1.bf16.msra.mxu0 %v485
    %588 = vmatprep.subr.bf16.mxu0 %v490
    %589 = vmatpush1.bf16.msra.mxu0 %v489
    %590 = vmatprep.subr.bf16.mxu0 %v494
    %591 = vmatpush1.bf16.msra.mxu0 %v493
    %592 = vmatprep.subr.bf16.mxu0 %v498
    %593 = vmatpush1.bf16.msra.mxu0 %v497
    %594 = vmatprep.subr.bf16.mxu0 %v502
    %595 = vmatpush1.bf16.msra.mxu0 %v501
    %596 = vmatprep.subr.bf16.mxu0 %v506
    %597 = vmatpush1.bf16.msra.mxu0 %v505
    %598 = vmatprep.subr.bf16.mxu0 0
    %599 = vmatpush1.bf16.msra.mxu0 0
    %600 = vmatprep.subr.bf16.mxu0 0
    %601 = vmatpush1.bf16.msra.mxu0 0
    %602 = vmatprep.subr.bf16.mxu0 0
    %603 = vmatpush1.bf16.msra.mxu0 0
    %604 = vmatprep.subr.bf16.mxu0 0
    %605 = vmatpush1.bf16.msra.mxu0 0
    %606 = vmatprep.subr.bf16.mxu0 0
    %607 = vmatpush1.bf16.msra.mxu0 0
    %608 = vmatprep.subr.bf16.mxu0 0
    %609 = vmatpush1.bf16.msra.mxu0 0
    %610 = vmatprep.subr.bf16.mxu0 0
    %611 = vmatpush1.bf16.msra.mxu0 0
    %612 = vmatprep.subr.bf16.mxu0 0
    %613 = vmatpush1.bf16.msra.mxu0 0
    %614 = vmatprep.mubr.bf16.mxu0 0
    %615 = vmatmul.mubr.bf16.gmra.mrb[0].mxu0 %v375
    %v616 = vpop.f32.mrb[0].mxu0
    %v617 = vadd.f32 0.0, %v616
    %v618 = vpop.f32.mrb[0].mxu0
    %v619 = vadd.f32 0.0, %v618
    %v620 = vpop.f32.mrb[0].mxu0
    %v621 = vadd.f32 0.0, %v620
    %v622 = vpop.f32.mrb[0].mxu0
    %v623 = vadd.f32 0.0, %v622
    %624 = vdwg.mxu0
    %v625 = vmax.f32 %v574, 0.0
    %v626 = vmax.f32 %v576, 0.0
    %v627 = vmax.f32 %v617, 0.0
    %v628 = vmax.f32 %v619, 0.0
    %v629 = vmax.f32 %v578, 0.0
    %v630 = vmax.f32 %v580, 0.0
    %v631 = vmax.f32 %v621, 0.0
    %v632 = vmax.f32 %v623, 0.0
    %v633 = vpack.c.bf16 %v629, %v625
    %v634 = vpack.c.bf16 %v630, %v626
    %v635 = vpack.c.bf16 %v631, %v627
    %v636 = vpack.c.bf16 %v632, %v628
    %v641 = vunpack.c.l.b16 %v633
    %v642 = vunpack.c.l.b16 %v634
    %v643 = vunpack.c.l.b16 %v635
    %v644 = vunpack.c.l.b16 %v636
    %v645 = vunpack.c.h.b16 %v633
    %v646 = vunpack.c.h.b16 %v634
    %v647 = vunpack.c.h.b16 %v635
    %v648 = vunpack.c.h.b16 %v636
    %v649 = vpack.c.b16 %v642, %v641
    %v650 = vpack.c.b16 %v644, %v643
    %v651 = vpack.c.b16 %v646, %v645
    %v652 = vpack.c.b16 %v648, %v647
    %657 = vst [vmem:[#allocation8] sm:$0xff] %v649
    %658 = vst [vmem:[#allocation8 + $0x8] sm:$0xff] %v650
    %659 = vst [vmem:[#allocation8 + $0x10] sm:$0xff] %v651
    %660 = vst [vmem:[#allocation8 + $0x18] sm:$0xff] %v652
    %661 = vmatprep.subr.bf16.mxu0 %v476
    %662 = vmatpush1.bf16.msra.mxu0 %v475
    %663 = vmatprep.subr.bf16.mxu0 %v480
    %664 = vmatpush1.bf16.msra.mxu0 %v479
    %665 = vmatprep.subr.bf16.mxu0 %v484
    %666 = vmatpush1.bf16.msra.mxu0 %v483
    %667 = vmatprep.subr.bf16.mxu0 %v488
    %668 = vmatpush1.bf16.msra.mxu0 %v487
    %669 = vmatprep.subr.bf16.mxu0 %v492
    %670 = vmatpush1.bf16.msra.mxu0 %v491
    %671 = vmatprep.subr.bf16.mxu0 %v496
    %672 = vmatpush1.bf16.msra.mxu0 %v495
    %673 = vmatprep.subr.bf16.mxu0 %v500
    %674 = vmatpush1.bf16.msra.mxu0 %v499
    %675 = vmatprep.subr.bf16.mxu0 %v504
    %676 = vmatpush1.bf16.msra.mxu0 %v503
    %677 = vmatprep.subr.bf16.mxu0 0
    %678 = vmatpush1.bf16.msra.mxu0 0
    %679 = vmatprep.subr.bf16.mxu0 0
    %680 = vmatpush1.bf16.msra.mxu0 0
    %681 = vmatprep.subr.bf16.mxu0 0
    %682 = vmatpush1.bf16.msra.mxu0 0
    %683 = vmatprep.subr.bf16.mxu0 0
    %684 = vmatpush1.bf16.msra.mxu0 0
    %685 = vmatprep.subr.bf16.mxu0 0
    %686 = vmatpush1.bf16.msra.mxu0 0
    %687 = vmatprep.subr.bf16.mxu0 0
    %688 = vmatpush1.bf16.msra.mxu0 0
    %689 = vmatprep.subr.bf16.mxu0 0
    %690 = vmatpush1.bf16.msra.mxu0 0
    %691 = vmatprep.subr.bf16.mxu0 0
    %692 = vmatpush1.bf16.msra.mxu0 0
    %693 = vmatprep.mubr.bf16.mxu0 0
    %694 = vmatmul.mubr.bf16.gmra.mrb[0].mxu0 %v376
    %v695 = vpop.f32.mrb[0].mxu0
    %v696 = vadd.f32 0.0, %v695
    %v697 = vpop.f32.mrb[0].mxu0
    %v698 = vadd.f32 0.0, %v697
    %v699 = vpop.f32.mrb[0].mxu0
    %v700 = vadd.f32 0.0, %v699
    %v701 = vpop.f32.mrb[0].mxu0
    %v702 = vadd.f32 0.0, %v701
    %703 = vdwg.mxu0
    %704 = vmatprep.subr.bf16.mxu0 %v478
    %705 = vmatpush1.bf16.msra.mxu0 %v477
    %706 = vmatprep.subr.bf16.mxu0 %v482
    %707 = vmatpush1.bf16.msra.mxu0 %v481
    %708 = vmatprep.subr.bf16.mxu0 %v486
    %709 = vmatpush1.bf16.msra.mxu0 %v485
    %710 = vmatprep.subr.bf16.mxu0 %v490
    %711 = vmatpush1.bf16.msra.mxu0 %v489
    %712 = vmatprep.subr.bf16.mxu0 %v494
    %713 = vmatpush1.bf16.msra.mxu0 %v493
    %714 = vmatprep.subr.bf16.mxu0 %v498
    %715 = vmatpush1.bf16.msra.mxu0 %v497
    %716 = vmatprep.subr.bf16.mxu0 %v502
    %717 = vmatpush1.bf16.msra.mxu0 %v501
    %718 = vmatprep.subr.bf16.mxu0 %v506
    %719 = vmatpush1.bf16.msra.mxu0 %v505
    %720 = vmatprep.subr.bf16.mxu0 0
    %721 = vmatpush1.bf16.msra.mxu0 0
    %722 = vmatprep.subr.bf16.mxu0 0
    %723 = vmatpush1.bf16.msra.mxu0 0
    %724 = vmatprep.subr.bf16.mxu0 0
    %725 = vmatpush1.bf16.msra.mxu0 0
    %726 = vmatprep.subr.bf16.mxu0 0
    %727 = vmatpush1.bf16.msra.mxu0 0
    %728 = vmatprep.subr.bf16.mxu0 0
    %729 = vmatpush1.bf16.msra.mxu0 0
    %730 = vmatprep.subr.bf16.mxu0 0
    %731 = vmatpush1.bf16.msra.mxu0 0
    %732 = vmatprep.subr.bf16.mxu0 0
    %733 = vmatpush1.bf16.msra.mxu0 0
    %734 = vmatprep.subr.bf16.mxu0 0
    %735 = vmatpush1.bf16.msra.mxu0 0
    %736 = vmatprep.mubr.bf16.mxu0 0
    %737 = vmatmul.mubr.bf16.gmra.mrb[0].mxu0 %v376
    %v738 = vpop.f32.mrb[0].mxu0
    %v739 = vadd.f32 0.0, %v738
    %v740 = vpop.f32.mrb[0].mxu0
    %v741 = vadd.f32 0.0, %v740
    %v742 = vpop.f32.mrb[0].mxu0
    %v743 = vadd.f32 0.0, %v742
    %v744 = vpop.f32.mrb[0].mxu0
    %v745 = vadd.f32 0.0, %v744
    %746 = vdwg.mxu0
    %v747 = vmax.f32 %v696, 0.0
    %v748 = vmax.f32 %v698, 0.0
    %v749 = vmax.f32 %v739, 0.0
    %v750 = vmax.f32 %v741, 0.0
    %v751 = vmax.f32 %v700, 0.0
    %v752 = vmax.f32 %v702, 0.0
    %v753 = vmax.f32 %v743, 0.0
    %v754 = vmax.f32 %v745, 0.0
    %v755 = vpack.c.bf16 %v751, %v747
    %v756 = vpack.c.bf16 %v752, %v748
    %v757 = vpack.c.bf16 %v753, %v749
    %v758 = vpack.c.bf16 %v754, %v750
    %v763 = vunpack.c.l.b16 %v755
    %v764 = vunpack.c.l.b16 %v756
    %v765 = vunpack.c.l.b16 %v757
    %v766 = vunpack.c.l.b16 %v758
    %v767 = vunpack.c.h.b16 %v755
    %v768 = vunpack.c.h.b16 %v756
    %v769 = vunpack.c.h.b16 %v757
    %v770 = vunpack.c.h.b16 %v758
    %v771 = vpack.c.b16 %v764, %v763
    %v772 = vpack.c.b16 %v766, %v765
    %v773 = vpack.c.b16 %v768, %v767
    %v774 = vpack.c.b16 %v770, %v769
    %s779 = scalar_lea.vmem [#allocation8], 32
    %780 = vst [vmem:[%s779] sm:$0xff] %v771
    %781 = vst [vmem:[%s779 + $0x8] sm:$0xff] %v772
    %782 = vst [vmem:[%s779 + $0x10] sm:$0xff] %v773
    %783 = vst [vmem:[%s779 + $0x18] sm:$0xff] %v774
    %784 = vmatprep.subr.bf16.mxu0 %v476
    %785 = vmatpush1.bf16.msra.mxu0 %v475
    %786 = vmatprep.subr.bf16.mxu0 %v480
    %787 = vmatpush1.bf16.msra.mxu0 %v479
    %788 = vmatprep.subr.bf16.mxu0 %v484
    %789 = vmatpush1.bf16.msra.mxu0 %v483
    %790 = vmatprep.subr.bf16.mxu0 %v488
    %791 = vmatpush1.bf16.msra.mxu0 %v487
    %792 = vmatprep.subr.bf16.mxu0 %v492
    %793 = vmatpush1.bf16.msra.mxu0 %v491
    %794 = vmatprep.subr.bf16.mxu0 %v496
    %795 = vmatpush1.bf16.msra.mxu0 %v495
    %796 = vmatprep.subr.bf16.mxu0 %v500
    %797 = vmatpush1.bf16.msra.mxu0 %v499
    %798 = vmatprep.subr.bf16.mxu0 %v504
    %799 = vmatpush1.bf16.msra.mxu0 %v503
    %800 = vmatprep.subr.bf16.mxu0 0
    %801 = vmatpush1.bf16.msra.mxu0 0
    %802 = vmatprep.subr.bf16.mxu0 0
    %803 = vmatpush1.bf16.msra.mxu0 0
    %804 = vmatprep.subr.bf16.mxu0 0
    %805 = vmatpush1.bf16.msra.mxu0 0
    %806 = vmatprep.subr.bf16.mxu0 0
    %807 = vmatpush1.bf16.msra.mxu0 0
    %808 = vmatprep.subr.bf16.mxu0 0
    %809 = vmatpush1.bf16.msra.mxu0 0
    %810 = vmatprep.subr.bf16.mxu0 0
    %811 = vmatpush1.bf16.msra.mxu0 0
    %812 = vmatprep.subr.bf16.mxu0 0
    %813 = vmatpush1.bf16.msra.mxu0 0
    %814 = vmatprep.subr.bf16.mxu0 0
    %815 = vmatpush1.bf16.msra.mxu0 0
    %816 = vmatprep.mubr.bf16.mxu0 0
    %817 = vmatmul.mubr.bf16.gmra.mrb[0].mxu0 %v377
    %v818 = vpop.f32.mrb[0].mxu0
    %v819 = vadd.f32 0.0, %v818
    %v820 = vpop.f32.mrb[0].mxu0
    %v821 = vadd.f32 0.0, %v820
    %v822 = vpop.f32.mrb[0].mxu0
    %v823 = vadd.f32 0.0, %v822
    %v824 = vpop.f32.mrb[0].mxu0
    %v825 = vadd.f32 0.0, %v824
    %826 = vdwg.mxu0
    %827 = vmatprep.subr.bf16.mxu0 %v478
    %828 = vmatpush1.bf16.msra.mxu0 %v477
    %829 = vmatprep.subr.bf16.mxu0 %v482
    %830 = vmatpush1.bf16.msra.mxu0 %v481
    %831 = vmatprep.subr.bf16.mxu0 %v486
    %832 = vmatpush1.bf16.msra.mxu0 %v485
    %833 = vmatprep.subr.bf16.mxu0 %v490
    %834 = vmatpush1.bf16.msra.mxu0 %v489
    %835 = vmatprep.subr.bf16.mxu0 %v494
    %836 = vmatpush1.bf16.msra.mxu0 %v493
    %837 = vmatprep.subr.bf16.mxu0 %v498
    %838 = vmatpush1.bf16.msra.mxu0 %v497
    %839 = vmatprep.subr.bf16.mxu0 %v502
    %840 = vmatpush1.bf16.msra.mxu0 %v501
    %841 = vmatprep.subr.bf16.mxu0 %v506
    %842 = vmatpush1.bf16.msra.mxu0 %v505
    %843 = vmatprep.subr.bf16.mxu0 0
    %844 = vmatpush1.bf16.msra.mxu0 0
    %845 = vmatprep.subr.bf16.mxu0 0
    %846 = vmatpush1.bf16.msra.mxu0 0
    %847 = vmatprep.subr.bf16.mxu0 0
    %848 = vmatpush1.bf16.msra.mxu0 0
    %849 = vmatprep.subr.bf16.mxu0 0
    %850 = vmatpush1.bf16.msra.mxu0 0
    %851 = vmatprep.subr.bf16.mxu0 0
    %852 = vmatpush1.bf16.msra.mxu0 0
    %853 = vmatprep.subr.bf16.mxu0 0
    %854 = vmatpush1.bf16.msra.mxu0 0
    %855 = vmatprep.subr.bf16.mxu0 0
    %856 = vmatpush1.bf16.msra.mxu0 0
    %857 = vmatprep.subr.bf16.mxu0 0
    %858 = vmatpush1.bf16.msra.mxu0 0
    %859 = vmatprep.mubr.bf16.mxu0 0
    %860 = vmatmul.mubr.bf16.gmra.mrb[0].mxu0 %v377
    %v861 = vpop.f32.mrb[0].mxu0
    %v862 = vadd.f32 0.0, %v861
    %v863 = vpop.f32.mrb[0].mxu0
    %v864 = vadd.f32 0.0, %v863
    %v865 = vpop.f32.mrb[0].mxu0
    %v866 = vadd.f32 0.0, %v865
    %v867 = vpop.f32.mrb[0].mxu0
    %v868 = vadd.f32 0.0, %v867
    %869 = vdwg.mxu0
    %v870 = vmax.f32 %v819, 0.0
    %v871 = vmax.f32 %v821, 0.0
    %v872 = vmax.f32 %v862, 0.0
    %v873 = vmax.f32 %v864, 0.0
    %v874 = vmax.f32 %v823, 0.0
    %v875 = vmax.f32 %v825, 0.0
    %v876 = vmax.f32 %v866, 0.0
    %v877 = vmax.f32 %v868, 0.0
    %v878 = vpack.c.bf16 %v874, %v870
    %v879 = vpack.c.bf16 %v875, %v871
    %v880 = vpack.c.bf16 %v876, %v872
    %v881 = vpack.c.bf16 %v877, %v873
    %v886 = vunpack.c.l.b16 %v878
    %v887 = vunpack.c.l.b16 %v879
    %v888 = vunpack.c.l.b16 %v880
    %v889 = vunpack.c.l.b16 %v881
    %v890 = vunpack.c.h.b16 %v878
    %v891 = vunpack.c.h.b16 %v879
    %v892 = vunpack.c.h.b16 %v880
    %v893 = vunpack.c.h.b16 %v881
    %v894 = vpack.c.b16 %v887, %v886
    %v895 = vpack.c.b16 %v889, %v888
    %v896 = vpack.c.b16 %v891, %v890
    %v897 = vpack.c.b16 %v893, %v892
    %s902 = scalar_lea.vmem [#allocation8], 64
    %903 = vst [vmem:[%s902] sm:$0xff] %v894
    %904 = vst [vmem:[%s902 + $0x8] sm:$0xff] %v895
    %905 = vst [vmem:[%s902 + $0x10] sm:$0xff] %v896
    %906 = vst [vmem:[%s902 + $0x18] sm:$0xff] %v897
    %907 = vmatprep.subr.bf16.mxu0 %v476
    %908 = vmatpush1.bf16.msra.mxu0 %v475
    %909 = vmatprep.subr.bf16.mxu0 %v480
    %910 = vmatpush1.bf16.msra.mxu0 %v479
    %911 = vmatprep.subr.bf16.mxu0 %v484
    %912 = vmatpush1.bf16.msra.mxu0 %v483
    %913 = vmatprep.subr.bf16.mxu0 %v488
    %914 = vmatpush1.bf16.msra.mxu0 %v487
    %915 = vmatprep.subr.bf16.mxu0 %v492
    %916 = vmatpush1.bf16.msra.mxu0 %v491
    %917 = vmatprep.subr.bf16.mxu0 %v496
    %918 = vmatpush1.bf16.msra.mxu0 %v495
    %919 = vmatprep.subr.bf16.mxu0 %v500
    %920 = vmatpush1.bf16.msra.mxu0 %v499
    %921 = vmatprep.subr.bf16.mxu0 %v504
    %922 = vmatpush1.bf16.msra.mxu0 %v503
    %923 = vmatprep.subr.bf16.mxu0 0
    %924 = vmatpush1.bf16.msra.mxu0 0
    %925 = vmatprep.subr.bf16.mxu0 0
    %926 = vmatpush1.bf16.msra.mxu0 0
    %927 = vmatprep.subr.bf16.mxu0 0
    %928 = vmatpush1.bf16.msra.mxu0 0
    %929 = vmatprep.subr.bf16.mxu0 0
    %930 = vmatpush1.bf16.msra.mxu0 0
    %931 = vmatprep.subr.bf16.mxu0 0
    %932 = vmatpush1.bf16.msra.mxu0 0
    %933 = vmatprep.subr.bf16.mxu0 0
    %934 = vmatpush1.bf16.msra.mxu0 0
    %935 = vmatprep.subr.bf16.mxu0 0
    %936 = vmatpush1.bf16.msra.mxu0 0
    %937 = vmatprep.subr.bf16.mxu0 0
    %938 = vmatpush1.bf16.msra.mxu0 0
    %939 = vmatprep.mubr.bf16.mxu0 0
    %940 = vmatmul.mubr.bf16.gmra.mrb[0].mxu0 %v378
    %v941 = vpop.f32.mrb[0].mxu0
    %v942 = vadd.f32 0.0, %v941
    %v943 = vpop.f32.mrb[0].mxu0
    %v944 = vadd.f32 0.0, %v943
    %v945 = vpop.f32.mrb[0].mxu0
    %v946 = vadd.f32 0.0, %v945
    %v947 = vpop.f32.mrb[0].mxu0
    %v948 = vadd.f32 0.0, %v947
    %949 = vdwg.mxu0
    %950 = vmatprep.subr.bf16.mxu0 %v478
    %951 = vmatpush1.bf16.msra.mxu0 %v477
    %952 = vmatprep.subr.bf16.mxu0 %v482
    %953 = vmatpush1.bf16.msra.mxu0 %v481
    %954 = vmatprep.subr.bf16.mxu0 %v486
    %955 = vmatpush1.bf16.msra.mxu0 %v485
    %956 = vmatprep.subr.bf16.mxu0 %v490
    %957 = vmatpush1.bf16.msra.mxu0 %v489
    %958 = vmatprep.subr.bf16.mxu0 %v494
    %959 = vmatpush1.bf16.msra.mxu0 %v493
    %960 = vmatprep.subr.bf16.mxu0 %v498
    %961 = vmatpush1.bf16.msra.mxu0 %v497
    %962 = vmatprep.subr.bf16.mxu0 %v502
    %963 = vmatpush1.bf16.msra.mxu0 %v501
    %964 = vmatprep.subr.bf16.mxu0 %v506
    %965 = vmatpush1.bf16.msra.mxu0 %v505
    %966 = vmatprep.subr.bf16.mxu0 0
    %967 = vmatpush1.bf16.msra.mxu0 0
    %968 = vmatprep.subr.bf16.mxu0 0
    %969 = vmatpush1.bf16.msra.mxu0 0
    %970 = vmatprep.subr.bf16.mxu0 0
    %971 = vmatpush1.bf16.msra.mxu0 0
    %972 = vmatprep.subr.bf16.mxu0 0
    %973 = vmatpush1.bf16.msra.mxu0 0
    %974 = vmatprep.subr.bf16.mxu0 0
    %975 = vmatpush1.bf16.msra.mxu0 0
    %976 = vmatprep.subr.bf16.mxu0 0
    %977 = vmatpush1.bf16.msra.mxu0 0
    %978 = vmatprep.subr.bf16.mxu0 0
    %979 = vmatpush1.bf16.msra.mxu0 0
    %980 = vmatprep.subr.bf16.mxu0 0
    %981 = vmatpush1.bf16.msra.mxu0 0
    %982 = vmatprep.mubr.bf16.mxu0 0
    %983 = vmatmul.mubr.bf16.gmra.mrb[0].mxu0 %v378
    %v984 = vpop.f32.mrb[0].mxu0
    %v985 = vadd.f32 0.0, %v984
    %v986 = vpop.f32.mrb[0].mxu0
    %v987 = vadd.f32 0.0, %v986
    %v988 = vpop.f32.mrb[0].mxu0
    %v989 = vadd.f32 0.0, %v988
    %v990 = vpop.f32.mrb[0].mxu0
    %v991 = vadd.f32 0.0, %v990
    %992 = vdwg.mxu0
    %v993 = vmax.f32 %v942, 0.0
    %v994 = vmax.f32 %v944, 0.0
    %v995 = vmax.f32 %v985, 0.0
    %v996 = vmax.f32 %v987, 0.0
    %v997 = vmax.f32 %v946, 0.0
    %v998 = vmax.f32 %v948, 0.0
    %v999 = vmax.f32 %v989, 0.0
    %v1000 = vmax.f32 %v991, 0.0
    %v1001 = vpack.c.bf16 %v997, %v993
    %v1002 = vpack.c.bf16 %v998, %v994
    %v1003 = vpack.c.bf16 %v999, %v995
    %v1004 = vpack.c.bf16 %v1000, %v996
    %v1009 = vunpack.c.l.b16 %v1001
    %v1010 = vunpack.c.l.b16 %v1002
    %v1011 = vunpack.c.l.b16 %v1003
    %v1012 = vunpack.c.l.b16 %v1004
    %v1013 = vunpack.c.h.b16 %v1001
    %v1014 = vunpack.c.h.b16 %v1002
    %v1015 = vunpack.c.h.b16 %v1003
    %v1016 = vunpack.c.h.b16 %v1004
    %v1017 = vpack.c.b16 %v1010, %v1009
    %v1018 = vpack.c.b16 %v1012, %v1011
    %v1019 = vpack.c.b16 %v1014, %v1013
    %v1020 = vpack.c.b16 %v1016, %v1015
    %s1025 = scalar_lea.vmem [#allocation8], 96
    %1026 = vst [vmem:[%s1025] sm:$0xff] %v1017
    %1027 = vst [vmem:[%s1025 + $0x8] sm:$0xff] %v1018
    %1028 = vst [vmem:[%s1025 + $0x10] sm:$0xff] %v1019
    %1029 = vst [vmem:[%s1025 + $0x18] sm:$0xff] %v1020
    %s1030 = scalar_lea.vmem [#allocation2], 8
    %v1031 = vld [vmem:[%s1030] sm:$0xf]
    %v1032 = vld [vmem:[%s1030 + $0x4] sm:$0xf]
    %s1033 = scalar_lea.vmem [#allocation5], 256
    %v1034 = vld [vmem:[%s1033] sm:$0xff]
    %v1035 = vld [vmem:[%s1033 + $0x8] sm:$0xff]
    %v1036 = vld [vmem:[%s1033 + $0x10] sm:$0xff]
    %v1037 = vld [vmem:[%s1033 + $0x18] sm:$0xff]
    %v1038 = vld [vmem:[%s1033 + $0x20] sm:$0xff]
    %v1039 = vld [vmem:[%s1033 + $0x28] sm:$0xff]
    %v1040 = vld [vmem:[%s1033 + $0x30] sm:$0xff]
    %v1041 = vld [vmem:[%s1033 + $0x38] sm:$0xff]
    %v1042 = vld [vmem:[%s1033 + $0x40] sm:$0xff]
    %v1043 = vld [vmem:[%s1033 + $0x48] sm:$0xff]
    %v1044 = vld [vmem:[%s1033 + $0x50] sm:$0xff]
    %v1045 = vld [vmem:[%s1033 + $0x58] sm:$0xff]
    %v1046 = vld [vmem:[%s1033 + $0x60] sm:$0xff]
    %v1047 = vld [vmem:[%s1033 + $0x68] sm:$0xff]
    %v1048 = vld [vmem:[%s1033 + $0x70] sm:$0xff]
    %v1049 = vld [vmem:[%s1033 + $0x78] sm:$0xff]
    %v1050 = vld [vmem:[%s1033 + $0x80] sm:$0xff]
    %v1051 = vld [vmem:[%s1033 + $0x88] sm:$0xff]
    %v1052 = vld [vmem:[%s1033 + $0x90] sm:$0xff]
    %v1053 = vld [vmem:[%s1033 + $0x98] sm:$0xff]
    %v1054 = vld [vmem:[%s1033 + $0xa0] sm:$0xff]
    %v1055 = vld [vmem:[%s1033 + $0xa8] sm:$0xff]
    %v1056 = vld [vmem:[%s1033 + $0xb0] sm:$0xff]
    %v1057 = vld [vmem:[%s1033 + $0xb8] sm:$0xff]
    %v1058 = vld [vmem:[%s1033 + $0xc0] sm:$0xff]
    %v1059 = vld [vmem:[%s1033 + $0xc8] sm:$0xff]
    %v1060 = vld [vmem:[%s1033 + $0xd0] sm:$0xff]
    %v1061 = vld [vmem:[%s1033 + $0xd8] sm:$0xff]
    %v1062 = vld [vmem:[%s1033 + $0xe0] sm:$0xff]
    %v1063 = vld [vmem:[%s1033 + $0xe8] sm:$0xff]
    %v1064 = vld [vmem:[%s1033 + $0xf0] sm:$0xff]
    %v1065 = vld [vmem:[%s1033 + $0xf8] sm:$0xff]
    %v1068 = vunpack.c.l.b16 %v1031
    %v1069 = vunpack.c.l.b16 %v1032
    %v1070 = vpack.c.b16 %v1069, %v1068
    %1072 = vmatprep.subr.bf16.mxu0 %v226
    %1073 = vmatpush1.bf16.msra.mxu0 %v225
    %1074 = vmatprep.subr.bf16.mxu0 %v230
    %1075 = vmatpush1.bf16.msra.mxu0 %v229
    %1076 = vmatprep.subr.bf16.mxu0 %v234
    %1077 = vmatpush1.bf16.msra.mxu0 %v233
    %1078 = vmatprep.subr.bf16.mxu0 %v238
    %1079 = vmatpush1.bf16.msra.mxu0 %v237
    %1080 = vmatprep.subr.bf16.mxu0 %v242
    %1081 = vmatpush1.bf16.msra.mxu0 %v241
    %1082 = vmatprep.subr.bf16.mxu0 %v246
    %1083 = vmatpush1.bf16.msra.mxu0 %v245
    %1084 = vmatprep.subr.bf16.mxu0 %v250
    %1085 = vmatpush1.bf16.msra.mxu0 %v249
    %1086 = vmatprep.subr.bf16.mxu0 %v254
    %1087 = vmatpush1.bf16.msra.mxu0 %v253
    %1088 = vmatprep.subr.bf16.mxu0 0
    %1089 = vmatpush1.bf16.msra.mxu0 0
    %1090 = vmatprep.subr.bf16.mxu0 0
    %1091 = vmatpush1.bf16.msra.mxu0 0
    %1092 = vmatprep.subr.bf16.mxu0 0
    %1093 = vmatpush1.bf16.msra.mxu0 0
    %1094 = vmatprep.subr.bf16.mxu0 0
    %1095 = vmatpush1.bf16.msra.mxu0 0
    %1096 = vmatprep.subr.bf16.mxu0 0
    %1097 = vmatpush1.bf16.msra.mxu0 0
    %1098 = vmatprep.subr.bf16.mxu0 0
    %1099 = vmatpush1.bf16.msra.mxu0 0
    %1100 = vmatprep.subr.bf16.mxu0 0
    %1101 = vmatpush1.bf16.msra.mxu0 0
    %1102 = vmatprep.subr.bf16.mxu0 0
    %1103 = vmatpush1.bf16.msra.mxu0 0
    %1104 = vmatprep.mubr.bf16.mxu0 0
    %1105 = vmatmul.mubr.bf16.gmra.mrb[0].mxu0 %v1070
    %v1106 = vpop.f32.mrb[0].mxu0
    %v1107 = vadd.f32 0.0, %v1106
    %v1108 = vpop.f32.mrb[0].mxu0
    %v1109 = vadd.f32 0.0, %v1108
    %v1110 = vpop.f32.mrb[0].mxu0
    %v1111 = vadd.f32 0.0, %v1110
    %v1112 = vpop.f32.mrb[0].mxu0
    %v1113 = vadd.f32 0.0, %v1112
    %1114 = vdwg.mxu0
    %1115 = vmatprep.subr.bf16.mxu0 %v228
    %1116 = vmatpush1.bf16.msra.mxu0 %v227
    %1117 = vmatprep.subr.bf16.mxu0 %v232
    %1118 = vmatpush1.bf16.msra.mxu0 %v231
    %1119 = vmatprep.subr.bf16.mxu0 %v236
    %1120 = vmatpush1.bf16.msra.mxu0 %v235
    %1121 = vmatprep.subr.bf16.mxu0 %v240
    %1122 = vmatpush1.bf16.msra.mxu0 %v239
    %1123 = vmatprep.subr.bf16.mxu0 %v244
    %1124 = vmatpush1.bf16.msra.mxu0 %v243
    %1125 = vmatprep.subr.bf16.mxu0 %v248
    %1126 = vmatpush1.bf16.msra.mxu0 %v247
    %1127 = vmatprep.subr.bf16.mxu0 %v252
    %1128 = vmatpush1.bf16.msra.mxu0 %v251
    %1129 = vmatprep.subr.bf16.mxu0 %v256
    %1130 = vmatpush1.bf16.msra.mxu0 %v255
    %1131 = vmatprep.subr.bf16.mxu0 0
    %1132 = vmatpush1.bf16.msra.mxu0 0
    %1133 = vmatprep.subr.bf16.mxu0 0
    %1134 = vmatpush1.bf16.msra.mxu0 0
    %1135 = vmatprep.subr.bf16.mxu0 0
    %1136 = vmatpush1.bf16.msra.mxu0 0
    %1137 = vmatprep.subr.bf16.mxu0 0
    %1138 = vmatpush1.bf16.msra.mxu0 0
    %1139 = vmatprep.subr.bf16.mxu0 0
    %1140 = vmatpush1.bf16.msra.mxu0 0
    %1141 = vmatprep.subr.bf16.mxu0 0
    %1142 = vmatpush1.bf16.msra.mxu0 0
    %1143 = vmatprep.subr.bf16.mxu0 0
    %1144 = vmatpush1.bf16.msra.mxu0 0
    %1145 = vmatprep.subr.bf16.mxu0 0
    %1146 = vmatpush1.bf16.msra.mxu0 0
    %1147 = vmatprep.mubr.bf16.mxu0 0
    %1148 = vmatmul.mubr.bf16.gmra.mrb[0].mxu0 %v1070
    %v1149 = vpop.f32.mrb[0].mxu0
    %v1150 = vadd.f32 0.0, %v1149
    %v1151 = vpop.f32.mrb[0].mxu0
    %v1152 = vadd.f32 0.0, %v1151
    %v1153 = vpop.f32.mrb[0].mxu0
    %v1154 = vadd.f32 0.0, %v1153
    %v1155 = vpop.f32.mrb[0].mxu0
    %v1156 = vadd.f32 0.0, %v1155
    %1157 = vdwg.mxu0
    %v1158 = vpack.c.bf16 %v1111, %v1107
    %v1159 = vpack.c.bf16 %v1113, %v1109
    %v1160 = vpack.c.bf16 %v1154, %v1150
    %v1161 = vpack.c.bf16 %v1156, %v1152
    %v1194 = vunpack.c.l.b16 %v1034
    %v1195 = vunpack.c.h.b16 %v1034
    %v1196 = vunpack.c.l.b16 %v1035
    %v1197 = vunpack.c.h.b16 %v1035
    %v1198 = vunpack.c.l.b16 %v1036
    %v1199 = vunpack.c.h.b16 %v1036
    %v1200 = vunpack.c.l.b16 %v1037
    %v1201 = vunpack.c.h.b16 %v1037
    %v1202 = vunpack.c.l.b16 %v1038
    %v1203 = vunpack.c.h.b16 %v1038
    %v1204 = vunpack.c.l.b16 %v1039
    %v1205 = vunpack.c.h.b16 %v1039
    %v1206 = vunpack.c.l.b16 %v1040
    %v1207 = vunpack.c.h.b16 %v1040
    %v1208 = vunpack.c.l.b16 %v1041
    %v1209 = vunpack.c.h.b16 %v1041
    %v1210 = vunpack.c.l.b16 %v1042
    %v1211 = vunpack.c.h.b16 %v1042
    %v1212 = vunpack.c.l.b16 %v1043
    %v1213 = vunpack.c.h.b16 %v1043
    %v1214 = vunpack.c.l.b16 %v1044
    %v1215 = vunpack.c.h.b16 %v1044
    %v1216 = vunpack.c.l.b16 %v1045
    %v1217 = vunpack.c.h.b16 %v1045
    %v1218 = vunpack.c.l.b16 %v1046
    %v1219 = vunpack.c.h.b16 %v1046
    %v1220 = vunpack.c.l.b16 %v1047
    %v1221 = vunpack.c.h.b16 %v1047
    %v1222 = vunpack.c.l.b16 %v1048
    %v1223 = vunpack.c.h.b16 %v1048
    %v1224 = vunpack.c.l.b16 %v1049
    %v1225 = vunpack.c.h.b16 %v1049
    %v1226 = vunpack.c.l.b16 %v1050
    %v1227 = vunpack.c.h.b16 %v1050
    %v1228 = vunpack.c.l.b16 %v1051
    %v1229 = vunpack.c.h.b16 %v1051
    %v1230 = vunpack.c.l.b16 %v1052
    %v1231 = vunpack.c.h.b16 %v1052
    %v1232 = vunpack.c.l.b16 %v1053
    %v1233 = vunpack.c.h.b16 %v1053
    %v1234 = vunpack.c.l.b16 %v1054
    %v1235 = vunpack.c.h.b16 %v1054
    %v1236 = vunpack.c.l.b16 %v1055
    %v1237 = vunpack.c.h.b16 %v1055
    %v1238 = vunpack.c.l.b16 %v1056
    %v1239 = vunpack.c.h.b16 %v1056
    %v1240 = vunpack.c.l.b16 %v1057
    %v1241 = vunpack.c.h.b16 %v1057
    %v1242 = vunpack.c.l.b16 %v1058
    %v1243 = vunpack.c.h.b16 %v1058
    %v1244 = vunpack.c.l.b16 %v1059
    %v1245 = vunpack.c.h.b16 %v1059
    %v1246 = vunpack.c.l.b16 %v1060
    %v1247 = vunpack.c.h.b16 %v1060
    %v1248 = vunpack.c.l.b16 %v1061
    %v1249 = vunpack.c.h.b16 %v1061
    %v1250 = vunpack.c.l.b16 %v1062
    %v1251 = vunpack.c.h.b16 %v1062
    %v1252 = vunpack.c.l.b16 %v1063
    %v1253 = vunpack.c.h.b16 %v1063
    %v1254 = vunpack.c.l.b16 %v1064
    %v1255 = vunpack.c.h.b16 %v1064
    %v1256 = vunpack.c.l.b16 %v1065
    %v1257 = vunpack.c.h.b16 %v1065
    %v1258 = vpack.c.b16 %v1198, %v1194
    %v1259 = vpack.c.b16 %v1199, %v1195
    %v1260 = vpack.c.b16 %v1200, %v1196
    %v1261 = vpack.c.b16 %v1201, %v1197
    %v1262 = vpack.c.b16 %v1206, %v1202
    %v1263 = vpack.c.b16 %v1207, %v1203
    %v1264 = vpack.c.b16 %v1208, %v1204
    %v1265 = vpack.c.b16 %v1209, %v1205
    %v1266 = vpack.c.b16 %v1214, %v1210
    %v1267 = vpack.c.b16 %v1215, %v1211
    %v1268 = vpack.c.b16 %v1216, %v1212
    %v1269 = vpack.c.b16 %v1217, %v1213
    %v1270 = vpack.c.b16 %v1222, %v1218
    %v1271 = vpack.c.b16 %v1223, %v1219
    %v1272 = vpack.c.b16 %v1224, %v1220
    %v1273 = vpack.c.b16 %v1225, %v1221
    %v1274 = vpack.c.b16 %v1230, %v1226
    %v1275 = vpack.c.b16 %v1231, %v1227
    %v1276 = vpack.c.b16 %v1232, %v1228
    %v1277 = vpack.c.b16 %v1233, %v1229
    %v1278 = vpack.c.b16 %v1238, %v1234
    %v1279 = vpack.c.b16 %v1239, %v1235
    %v1280 = vpack.c.b16 %v1240, %v1236
    %v1281 = vpack.c.b16 %v1241, %v1237
    %v1282 = vpack.c.b16 %v1246, %v1242
    %v1283 = vpack.c.b16 %v1247, %v1243
    %v1284 = vpack.c.b16 %v1248, %v1244
    %v1285 = vpack.c.b16 %v1249, %v1245
    %v1286 = vpack.c.b16 %v1254, %v1250
    %v1287 = vpack.c.b16 %v1255, %v1251
    %v1288 = vpack.c.b16 %v1256, %v1252
    %v1289 = vpack.c.b16 %v1257, %v1253
    %1322 = vmatprep.subr.bf16.mxu0 %v1259
    %1323 = vmatpush1.bf16.msra.mxu0 %v1258
    %1324 = vmatprep.subr.bf16.mxu0 %v1263
    %1325 = vmatpush1.bf16.msra.mxu0 %v1262
    %1326 = vmatprep.subr.bf16.mxu0 %v1267
    %1327 = vmatpush1.bf16.msra.mxu0 %v1266
    %1328 = vmatprep.subr.bf16.mxu0 %v1271
    %1329 = vmatpush1.bf16.msra.mxu0 %v1270
    %1330 = vmatprep.subr.bf16.mxu0 %v1275
    %1331 = vmatpush1.bf16.msra.mxu0 %v1274
    %1332 = vmatprep.subr.bf16.mxu0 %v1279
    %1333 = vmatpush1.bf16.msra.mxu0 %v1278
    %1334 = vmatprep.subr.bf16.mxu0 %v1283
    %1335 = vmatpush1.bf16.msra.mxu0 %v1282
    %1336 = vmatprep.subr.bf16.mxu0 %v1287
    %1337 = vmatpush1.bf16.msra.mxu0 %v1286
    %1338 = vmatprep.subr.bf16.mxu0 0
    %1339 = vmatpush1.bf16.msra.mxu0 0
    %1340 = vmatprep.subr.bf16.mxu0 0
    %1341 = vmatpush1.bf16.msra.mxu0 0
    %1342 = vmatprep.subr.bf16.mxu0 0
    %1343 = vmatpush1.bf16.msra.mxu0 0
    %1344 = vmatprep.subr.bf16.mxu0 0
    %1345 = vmatpush1.bf16.msra.mxu0 0
    %1346 = vmatprep.subr.bf16.mxu0 0
    %1347 = vmatpush1.bf16.msra.mxu0 0
    %1348 = vmatprep.subr.bf16.mxu0 0
    %1349 = vmatpush1.bf16.msra.mxu0 0
    %1350 = vmatprep.subr.bf16.mxu0 0
    %1351 = vmatpush1.bf16.msra.mxu0 0
    %1352 = vmatprep.subr.bf16.mxu0 0
    %1353 = vmatpush1.bf16.msra.mxu0 0
    %1354 = vmatprep.mubr.bf16.mxu0 0
    %1355 = vmatmul.mubr.bf16.gmra.mrb[0].mxu0 %v1158
    %v1356 = vpop.f32.mrb[0].mxu0
    %v1357 = vadd.f32 0.0, %v1356
    %v1358 = vpop.f32.mrb[0].mxu0
    %v1359 = vadd.f32 0.0, %v1358
    %v1360 = vpop.f32.mrb[0].mxu0
    %v1361 = vadd.f32 0.0, %v1360
    %v1362 = vpop.f32.mrb[0].mxu0
    %v1363 = vadd.f32 0.0, %v1362
    %1364 = vdwg.mxu0
    %1365 = vmatprep.subr.bf16.mxu0 %v1261
    %1366 = vmatpush1.bf16.msra.mxu0 %v1260
    %1367 = vmatprep.subr.bf16.mxu0 %v1265
    %1368 = vmatpush1.bf16.msra.mxu0 %v1264
    %1369 = vmatprep.subr.bf16.mxu0 %v1269
    %1370 = vmatpush1.bf16.msra.mxu0 %v1268
    %1371 = vmatprep.subr.bf16.mxu0 %v1273
    %1372 = vmatpush1.bf16.msra.mxu0 %v1272
    %1373 = vmatprep.subr.bf16.mxu0 %v1277
    %1374 = vmatpush1.bf16.msra.mxu0 %v1276
    %1375 = vmatprep.subr.bf16.mxu0 %v1281
    %1376 = vmatpush1.bf16.msra.mxu0 %v1280
    %1377 = vmatprep.subr.bf16.mxu0 %v1285
    %1378 = vmatpush1.bf16.msra.mxu0 %v1284
    %1379 = vmatprep.subr.bf16.mxu0 %v1289
    %1380 = vmatpush1.bf16.msra.mxu0 %v1288
    %1381 = vmatprep.subr.bf16.mxu0 0
    %1382 = vmatpush1.bf16.msra.mxu0 0
    %1383 = vmatprep.subr.bf16.mxu0 0
    %1384 = vmatpush1.bf16.msra.mxu0 0
    %1385 = vmatprep.subr.bf16.mxu0 0
    %1386 = vmatpush1.bf16.msra.mxu0 0
    %1387 = vmatprep.subr.bf16.mxu0 0
    %1388 = vmatpush1.bf16.msra.mxu0 0
    %1389 = vmatprep.subr.bf16.mxu0 0
    %1390 = vmatpush1.bf16.msra.mxu0 0
    %1391 = vmatprep.subr.bf16.mxu0 0
    %1392 = vmatpush1.bf16.msra.mxu0 0
    %1393 = vmatprep.subr.bf16.mxu0 0
    %1394 = vmatpush1.bf16.msra.mxu0 0
    %1395 = vmatprep.subr.bf16.mxu0 0
    %1396 = vmatpush1.bf16.msra.mxu0 0
    %1397 = vmatprep.mubr.bf16.mxu0 0
    %1398 = vmatmul.mubr.bf16.gmra.mrb[0].mxu0 %v1158
    %v1399 = vpop.f32.mrb[0].mxu0
    %v1400 = vadd.f32 0.0, %v1399
    %v1401 = vpop.f32.mrb[0].mxu0
    %v1402 = vadd.f32 0.0, %v1401
    %v1403 = vpop.f32.mrb[0].mxu0
    %v1404 = vadd.f32 0.0, %v1403
    %v1405 = vpop.f32.mrb[0].mxu0
    %v1406 = vadd.f32 0.0, %v1405
    %1407 = vdwg.mxu0
    %v1408 = vmax.f32 %v1357, 0.0
    %v1409 = vmax.f32 %v1359, 0.0
    %v1410 = vmax.f32 %v1400, 0.0
    %v1411 = vmax.f32 %v1402, 0.0
    %v1412 = vmax.f32 %v1361, 0.0
    %v1413 = vmax.f32 %v1363, 0.0
    %v1414 = vmax.f32 %v1404, 0.0
    %v1415 = vmax.f32 %v1406, 0.0
    %v1416 = vpack.c.bf16 %v1412, %v1408
    %v1417 = vpack.c.bf16 %v1413, %v1409
    %v1418 = vpack.c.bf16 %v1414, %v1410
    %v1419 = vpack.c.bf16 %v1415, %v1411
    %v1424 = vunpack.c.l.b16 %v1416
    %v1425 = vunpack.c.l.b16 %v1417
    %v1426 = vunpack.c.l.b16 %v1418
    %v1427 = vunpack.c.l.b16 %v1419
    %v1428 = vunpack.c.h.b16 %v1416
    %v1429 = vunpack.c.h.b16 %v1417
    %v1430 = vunpack.c.h.b16 %v1418
    %v1431 = vunpack.c.h.b16 %v1419
    %v1432 = vpack.c.b16 %v1425, %v1424
    %v1433 = vpack.c.b16 %v1427, %v1426
    %v1434 = vpack.c.b16 %v1429, %v1428
    %v1435 = vpack.c.b16 %v1431, %v1430
    %s1440 = scalar_lea.vmem [#allocation8], 128
    %1441 = vst [vmem:[%s1440] sm:$0xff] %v1432
    %1442 = vst [vmem:[%s1440 + $0x8] sm:$0xff] %v1433
    %1443 = vst [vmem:[%s1440 + $0x10] sm:$0xff] %v1434
    %1444 = vst [vmem:[%s1440 + $0x18] sm:$0xff] %v1435
    %1445 = vmatprep.subr.bf16.mxu0 %v1259
    %1446 = vmatpush1.bf16.msra.mxu0 %v1258
    %1447 = vmatprep.subr.bf16.mxu0 %v1263
    %1448 = vmatpush1.bf16.msra.mxu0 %v1262
    %1449 = vmatprep.subr.bf16.mxu0 %v1267
    %1450 = vmatpush1.bf16.msra.mxu0 %v1266
    %1451 = vmatprep.subr.bf16.mxu0 %v1271
    %1452 = vmatpush1.bf16.msra.mxu0 %v1270
    %1453 = vmatprep.subr.bf16.mxu0 %v1275
    %1454 = vmatpush1.bf16.msra.mxu0 %v1274
    %1455 = vmatprep.subr.bf16.mxu0 %v1279
    %1456 = vmatpush1.bf16.msra.mxu0 %v1278
    %1457 = vmatprep.subr.bf16.mxu0 %v1283
    %1458 = vmatpush1.bf16.msra.mxu0 %v1282
    %1459 = vmatprep.subr.bf16.mxu0 %v1287
    %1460 = vmatpush1.bf16.msra.mxu0 %v1286
    %1461 = vmatprep.subr.bf16.mxu0 0
    %1462 = vmatpush1.bf16.msra.mxu0 0
    %1463 = vmatprep.subr.bf16.mxu0 0
    %1464 = vmatpush1.bf16.msra.mxu0 0
    %1465 = vmatprep.subr.bf16.mxu0 0
    %1466 = vmatpush1.bf16.msra.mxu0 0
    %1467 = vmatprep.subr.bf16.mxu0 0
    %1468 = vmatpush1.bf16.msra.mxu0 0
    %1469 = vmatprep.subr.bf16.mxu0 0
    %1470 = vmatpush1.bf16.msra.mxu0 0
    %1471 = vmatprep.subr.bf16.mxu0 0
    %1472 = vmatpush1.bf16.msra.mxu0 0
    %1473 = vmatprep.subr.bf16.mxu0 0
    %1474 = vmatpush1.bf16.msra.mxu0 0
    %1475 = vmatprep.subr.bf16.mxu0 0
    %1476 = vmatpush1.bf16.msra.mxu0 0
    %1477 = vmatprep.mubr.bf16.mxu0 0
    %1478 = vmatmul.mubr.bf16.gmra.mrb[0].mxu0 %v1159
    %v1479 = vpop.f32.mrb[0].mxu0
    %v1480 = vadd.f32 0.0, %v1479
    %v1481 = vpop.f32.mrb[0].mxu0
    %v1482 = vadd.f32 0.0, %v1481
    %v1483 = vpop.f32.mrb[0].mxu0
    %v1484 = vadd.f32 0.0, %v1483
    %v1485 = vpop.f32.mrb[0].mxu0
    %v1486 = vadd.f32 0.0, %v1485
    %1487 = vdwg.mxu0
    %1488 = vmatprep.subr.bf16.mxu0 %v1261
    %1489 = vmatpush1.bf16.msra.mxu0 %v1260
    %1490 = vmatprep.subr.bf16.mxu0 %v1265
    %1491 = vmatpush1.bf16.msra.mxu0 %v1264
    %1492 = vmatprep.subr.bf16.mxu0 %v1269
    %1493 = vmatpush1.bf16.msra.mxu0 %v1268
    %1494 = vmatprep.subr.bf16.mxu0 %v1273
    %1495 = vmatpush1.bf16.msra.mxu0 %v1272
    %1496 = vmatprep.subr.bf16.mxu0 %v1277
    %1497 = vmatpush1.bf16.msra.mxu0 %v1276
    %1498 = vmatprep.subr.bf16.mxu0 %v1281
    %1499 = vmatpush1.bf16.msra.mxu0 %v1280
    %1500 = vmatprep.subr.bf16.mxu0 %v1285
    %1501 = vmatpush1.bf16.msra.mxu0 %v1284
    %1502 = vmatprep.subr.bf16.mxu0 %v1289
    %1503 = vmatpush1.bf16.msra.mxu0 %v1288
    %1504 = vmatprep.subr.bf16.mxu0 0
    %1505 = vmatpush1.bf16.msra.mxu0 0
    %1506 = vmatprep.subr.bf16.mxu0 0
    %1507 = vmatpush1.bf16.msra.mxu0 0
    %1508 = vmatprep.subr.bf16.mxu0 0
    %1509 = vmatpush1.bf16.msra.mxu0 0
    %1510 = vmatprep.subr.bf16.mxu0 0
    %1511 = vmatpush1.bf16.msra.mxu0 0
    %1512 = vmatprep.subr.bf16.mxu0 0
    %1513 = vmatpush1.bf16.msra.mxu0 0
    %1514 = vmatprep.subr.bf16.mxu0 0
    %1515 = vmatpush1.bf16.msra.mxu0 0
    %1516 = vmatprep.subr.bf16.mxu0 0
    %1517 = vmatpush1.bf16.msra.mxu0 0
    %1518 = vmatprep.subr.bf16.mxu0 0
    %1519 = vmatpush1.bf16.msra.mxu0 0
    %1520 = vmatprep.mubr.bf16.mxu0 0
    %1521 = vmatmul.mubr.bf16.gmra.mrb[0].mxu0 %v1159
    %v1522 = vpop.f32.mrb[0].mxu0
    %v1523 = vadd.f32 0.0, %v1522
    %v1524 = vpop.f32.mrb[0].mxu0
    %v1525 = vadd.f32 0.0, %v1524
    %v1526 = vpop.f32.mrb[0].mxu0
    %v1527 = vadd.f32 0.0, %v1526
    %v1528 = vpop.f32.mrb[0].mxu0
    %v1529 = vadd.f32 0.0, %v1528
    %1530 = vdwg.mxu0
    %v1531 = vmax.f32 %v1480, 0.0
    %v1532 = vmax.f32 %v1482, 0.0
    %v1533 = vmax.f32 %v1523, 0.0
    %v1534 = vmax.f32 %v1525, 0.0
    %v1535 = vmax.f32 %v1484, 0.0
    %v1536 = vmax.f32 %v1486, 0.0
    %v1537 = vmax.f32 %v1527, 0.0
    %v1538 = vmax.f32 %v1529, 0.0
    %v1539 = vpack.c.bf16 %v1535, %v1531
    %v1540 = vpack.c.bf16 %v1536, %v1532
    %v1541 = vpack.c.bf16 %v1537, %v1533
    %v1542 = vpack.c.bf16 %v1538, %v1534
    %v1547 = vunpack.c.l.b16 %v1539
    %v1548 = vunpack.c.l.b16 %v1540
    %v1549 = vunpack.c.l.b16 %v1541
    %v1550 = vunpack.c.l.b16 %v1542
    %v1551 = vunpack.c.h.b16 %v1539
    %v1552 = vunpack.c.h.b16 %v1540
    %v1553 = vunpack.c.h.b16 %v1541
    %v1554 = vunpack.c.h.b16 %v1542
    %v1555 = vpack.c.b16 %v1548, %v1547
    %v1556 = vpack.c.b16 %v1550, %v1549
    %v1557 = vpack.c.b16 %v1552, %v1551
    %v1558 = vpack.c.b16 %v1554, %v1553
    %s1563 = scalar_lea.vmem [#allocation8], 160
    %1564 = vst [vmem:[%s1563] sm:$0xff] %v1555
    %1565 = vst [vmem:[%s1563 + $0x8] sm:$0xff] %v1556
    %1566 = vst [vmem:[%s1563 + $0x10] sm:$0xff] %v1557
    %1567 = vst [vmem:[%s1563 + $0x18] sm:$0xff] %v1558
    %1568 = vmatprep.subr.bf16.mxu0 %v1259
    %1569 = vmatpush1.bf16.msra.mxu0 %v1258
    %1570 = vmatprep.subr.bf16.mxu0 %v1263
    %1571 = vmatpush1.bf16.msra.mxu0 %v1262
    %1572 = vmatprep.subr.bf16.mxu0 %v1267
    %1573 = vmatpush1.bf16.msra.mxu0 %v1266
    %1574 = vmatprep.subr.bf16.mxu0 %v1271
    %1575 = vmatpush1.bf16.msra.mxu0 %v1270
    %1576 = vmatprep.subr.bf16.mxu0 %v1275
    %1577 = vmatpush1.bf16.msra.mxu0 %v1274
    %1578 = vmatprep.subr.bf16.mxu0 %v1279
    %1579 = vmatpush1.bf16.msra.mxu0 %v1278
    %1580 = vmatprep.subr.bf16.mxu0 %v1283
    %1581 = vmatpush1.bf16.msra.mxu0 %v1282
    %1582 = vmatprep.subr.bf16.mxu0 %v1287
    %1583 = vmatpush1.bf16.msra.mxu0 %v1286
    %1584 = vmatprep.subr.bf16.mxu0 0
    %1585 = vmatpush1.bf16.msra.mxu0 0
    %1586 = vmatprep.subr.bf16.mxu0 0
    %1587 = vmatpush1.bf16.msra.mxu0 0
    %1588 = vmatprep.subr.bf16.mxu0 0
    %1589 = vmatpush1.bf16.msra.mxu0 0
    %1590 = vmatprep.subr.bf16.mxu0 0
    %1591 = vmatpush1.bf16.msra.mxu0 0
    %1592 = vmatprep.subr.bf16.mxu0 0
    %1593 = vmatpush1.bf16.msra.mxu0 0
    %1594 = vmatprep.subr.bf16.mxu0 0
    %1595 = vmatpush1.bf16.msra.mxu0 0
    %1596 = vmatprep.subr.bf16.mxu0 0
    %1597 = vmatpush1.bf16.msra.mxu0 0
    %1598 = vmatprep.subr.bf16.mxu0 0
    %1599 = vmatpush1.bf16.msra.mxu0 0
    %1600 = vmatprep.mubr.bf16.mxu0 0
    %1601 = vmatmul.mubr.bf16.gmra.mrb[0].mxu0 %v1160
    %v1602 = vpop.f32.mrb[0].mxu0
    %v1603 = vadd.f32 0.0, %v1602
    %v1604 = vpop.f32.mrb[0].mxu0
    %v1605 = vadd.f32 0.0, %v1604
    %v1606 = vpop.f32.mrb[0].mxu0
    %v1607 = vadd.f32 0.0, %v1606
    %v1608 = vpop.f32.mrb[0].mxu0
    %v1609 = vadd.f32 0.0, %v1608
    %1610 = vdwg.mxu0
    %1611 = vmatprep.subr.bf16.mxu0 %v1261
    %1612 = vmatpush1.bf16.msra.mxu0 %v1260
    %1613 = vmatprep.subr.bf16.mxu0 %v1265
    %1614 = vmatpush1.bf16.msra.mxu0 %v1264
    %1615 = vmatprep.subr.bf16.mxu0 %v1269
    %1616 = vmatpush1.bf16.msra.mxu0 %v1268
    %1617 = vmatprep.subr.bf16.mxu0 %v1273
    %1618 = vmatpush1.bf16.msra.mxu0 %v1272
    %1619 = vmatprep.subr.bf16.mxu0 %v1277
    %1620 = vmatpush1.bf16.msra.mxu0 %v1276
    %1621 = vmatprep.subr.bf16.mxu0 %v1281
    %1622 = vmatpush1.bf16.msra.mxu0 %v1280
    %1623 = vmatprep.subr.bf16.mxu0 %v1285
    %1624 = vmatpush1.bf16.msra.mxu0 %v1284
    %1625 = vmatprep.subr.bf16.mxu0 %v1289
    %1626 = vmatpush1.bf16.msra.mxu0 %v1288
    %1627 = vmatprep.subr.bf16.mxu0 0
    %1628 = vmatpush1.bf16.msra.mxu0 0
    %1629 = vmatprep.subr.bf16.mxu0 0
    %1630 = vmatpush1.bf16.msra.mxu0 0
    %1631 = vmatprep.subr.bf16.mxu0 0
    %1632 = vmatpush1.bf16.msra.mxu0 0
    %1633 = vmatprep.subr.bf16.mxu0 0
    %1634 = vmatpush1.bf16.msra.mxu0 0
    %1635 = vmatprep.subr.bf16.mxu0 0
    %1636 = vmatpush1.bf16.msra.mxu0 0
    %1637 = vmatprep.subr.bf16.mxu0 0
    %1638 = vmatpush1.bf16.msra.mxu0 0
    %1639 = vmatprep.subr.bf16.mxu0 0
    %1640 = vmatpush1.bf16.msra.mxu0 0
    %1641 = vmatprep.subr.bf16.mxu0 0
    %1642 = vmatpush1.bf16.msra.mxu0 0
    %1643 = vmatprep.mubr.bf16.mxu0 0
    %1644 = vmatmul.mubr.bf16.gmra.mrb[0].mxu0 %v1160
    %v1645 = vpop.f32.mrb[0].mxu0
    %v1646 = vadd.f32 0.0, %v1645
    %v1647 = vpop.f32.mrb[0].mxu0
    %v1648 = vadd.f32 0.0, %v1647
    %v1649 = vpop.f32.mrb[0].mxu0
    %v1650 = vadd.f32 0.0, %v1649
    %v1651 = vpop.f32.mrb[0].mxu0
    %v1652 = vadd.f32 0.0, %v1651
    %1653 = vdwg.mxu0
    %v1654 = vmax.f32 %v1603, 0.0
    %v1655 = vmax.f32 %v1605, 0.0
    %v1656 = vmax.f32 %v1646, 0.0
    %v1657 = vmax.f32 %v1648, 0.0
    %v1658 = vmax.f32 %v1607, 0.0
    %v1659 = vmax.f32 %v1609, 0.0
    %v1660 = vmax.f32 %v1650, 0.0
    %v1661 = vmax.f32 %v1652, 0.0
    %v1662 = vpack.c.bf16 %v1658, %v1654
    %v1663 = vpack.c.bf16 %v1659, %v1655
    %v1664 = vpack.c.bf16 %v1660, %v1656
    %v1665 = vpack.c.bf16 %v1661, %v1657
    %v1670 = vunpack.c.l.b16 %v1662
    %v1671 = vunpack.c.l.b16 %v1663
    %v1672 = vunpack.c.l.b16 %v1664
    %v1673 = vunpack.c.l.b16 %v1665
    %v1674 = vunpack.c.h.b16 %v1662
    %v1675 = vunpack.c.h.b16 %v1663
    %v1676 = vunpack.c.h.b16 %v1664
    %v1677 = vunpack.c.h.b16 %v1665
    %v1678 = vpack.c.b16 %v1671, %v1670
    %v1679 = vpack.c.b16 %v1673, %v1672
    %v1680 = vpack.c.b16 %v1675, %v1674
    %v1681 = vpack.c.b16 %v1677, %v1676
    %s1686 = scalar_lea.vmem [#allocation8], 192
    %1687 = vst [vmem:[%s1686] sm:$0xff] %v1678
    %1688 = vst [vmem:[%s1686 + $0x8] sm:$0xff] %v1679
    %1689 = vst [vmem:[%s1686 + $0x10] sm:$0xff] %v1680
    %1690 = vst [vmem:[%s1686 + $0x18] sm:$0xff] %v1681
    %1691 = vmatprep.subr.bf16.mxu0 %v1259
    %1692 = vmatpush1.bf16.msra.mxu0 %v1258
    %1693 = vmatprep.subr.bf16.mxu0 %v1263
    %1694 = vmatpush1.bf16.msra.mxu0 %v1262
    %1695 = vmatprep.subr.bf16.mxu0 %v1267
    %1696 = vmatpush1.bf16.msra.mxu0 %v1266
    %1697 = vmatprep.subr.bf16.mxu0 %v1271
    %1698 = vmatpush1.bf16.msra.mxu0 %v1270
    %1699 = vmatprep.subr.bf16.mxu0 %v1275
    %1700 = vmatpush1.bf16.msra.mxu0 %v1274
    %1701 = vmatprep.subr.bf16.mxu0 %v1279
    %1702 = vmatpush1.bf16.msra.mxu0 %v1278
    %1703 = vmatprep.subr.bf16.mxu0 %v1283
    %1704 = vmatpush1.bf16.msra.mxu0 %v1282
    %1705 = vmatprep.subr.bf16.mxu0 %v1287
    %1706 = vmatpush1.bf16.msra.mxu0 %v1286
    %1707 = vmatprep.subr.bf16.mxu0 0
    %1708 = vmatpush1.bf16.msra.mxu0 0
    %1709 = vmatprep.subr.bf16.mxu0 0
    %1710 = vmatpush1.bf16.msra.mxu0 0
    %1711 = vmatprep.subr.bf16.mxu0 0
    %1712 = vmatpush1.bf16.msra.mxu0 0
    %1713 = vmatprep.subr.bf16.mxu0 0
    %1714 = vmatpush1.bf16.msra.mxu0 0
    %1715 = vmatprep.subr.bf16.mxu0 0
    %1716 = vmatpush1.bf16.msra.mxu0 0
    %1717 = vmatprep.subr.bf16.mxu0 0
    %1718 = vmatpush1.bf16.msra.mxu0 0
    %1719 = vmatprep.subr.bf16.mxu0 0
    %1720 = vmatpush1.bf16.msra.mxu0 0
    %1721 = vmatprep.subr.bf16.mxu0 0
    %1722 = vmatpush1.bf16.msra.mxu0 0
    %1723 = vmatprep.mubr.bf16.mxu0 0
    %1724 = vmatmul.mubr.bf16.gmra.mrb[0].mxu0 %v1161
    %v1725 = vpop.f32.mrb[0].mxu0
    %v1726 = vadd.f32 0.0, %v1725
    %v1727 = vpop.f32.mrb[0].mxu0
    %v1728 = vadd.f32 0.0, %v1727
    %v1729 = vpop.f32.mrb[0].mxu0
    %v1730 = vadd.f32 0.0, %v1729
    %v1731 = vpop.f32.mrb[0].mxu0
    %v1732 = vadd.f32 0.0, %v1731
    %1733 = vdwg.mxu0
    %1734 = vmatprep.subr.bf16.mxu0 %v1261
    %1735 = vmatpush1.bf16.msra.mxu0 %v1260
    %1736 = vmatprep.subr.bf16.mxu0 %v1265
    %1737 = vmatpush1.bf16.msra.mxu0 %v1264
    %1738 = vmatprep.subr.bf16.mxu0 %v1269
    %1739 = vmatpush1.bf16.msra.mxu0 %v1268
    %1740 = vmatprep.subr.bf16.mxu0 %v1273
    %1741 = vmatpush1.bf16.msra.mxu0 %v1272
    %1742 = vmatprep.subr.bf16.mxu0 %v1277
    %1743 = vmatpush1.bf16.msra.mxu0 %v1276
    %1744 = vmatprep.subr.bf16.mxu0 %v1281
    %1745 = vmatpush1.bf16.msra.mxu0 %v1280
    %1746 = vmatprep.subr.bf16.mxu0 %v1285
    %1747 = vmatpush1.bf16.msra.mxu0 %v1284
    %1748 = vmatprep.subr.bf16.mxu0 %v1289
    %1749 = vmatpush1.bf16.msra.mxu0 %v1288
    %1750 = vmatprep.subr.bf16.mxu0 0
    %1751 = vmatpush1.bf16.msra.mxu0 0
    %1752 = vmatprep.subr.bf16.mxu0 0
    %1753 = vmatpush1.bf16.msra.mxu0 0
    %1754 = vmatprep.subr.bf16.mxu0 0
    %1755 = vmatpush1.bf16.msra.mxu0 0
    %1756 = vmatprep.subr.bf16.mxu0 0
    %1757 = vmatpush1.bf16.msra.mxu0 0
    %1758 = vmatprep.subr.bf16.mxu0 0
    %1759 = vmatpush1.bf16.msra.mxu0 0
    %1760 = vmatprep.subr.bf16.mxu0 0
    %1761 = vmatpush1.bf16.msra.mxu0 0
    %1762 = vmatprep.subr.bf16.mxu0 0
    %1763 = vmatpush1.bf16.msra.mxu0 0
    %1764 = vmatprep.subr.bf16.mxu0 0
    %1765 = vmatpush1.bf16.msra.mxu0 0
    %1766 = vmatprep.mubr.bf16.mxu0 0
    %1767 = vmatmul.mubr.bf16.gmra.mrb[0].mxu0 %v1161
    %v1768 = vpop.f32.mrb[0].mxu0
    %v1769 = vadd.f32 0.0, %v1768
    %v1770 = vpop.f32.mrb[0].mxu0
    %v1771 = vadd.f32 0.0, %v1770
    %v1772 = vpop.f32.mrb[0].mxu0
    %v1773 = vadd.f32 0.0, %v1772
    %v1774 = vpop.f32.mrb[0].mxu0
    %v1775 = vadd.f32 0.0, %v1774
    %1776 = vdwg.mxu0
    %v1777 = vmax.f32 %v1726, 0.0
    %v1778 = vmax.f32 %v1728, 0.0
    %v1779 = vmax.f32 %v1769, 0.0
    %v1780 = vmax.f32 %v1771, 0.0
    %v1781 = vmax.f32 %v1730, 0.0
    %v1782 = vmax.f32 %v1732, 0.0
    %v1783 = vmax.f32 %v1773, 0.0
    %v1784 = vmax.f32 %v1775, 0.0
    %v1785 = vpack.c.bf16 %v1781, %v1777
    %v1786 = vpack.c.bf16 %v1782, %v1778
    %v1787 = vpack.c.bf16 %v1783, %v1779
    %v1788 = vpack.c.bf16 %v1784, %v1780
    %v1793 = vunpack.c.l.b16 %v1785
    %v1794 = vunpack.c.l.b16 %v1786
    %v1795 = vunpack.c.l.b16 %v1787
    %v1796 = vunpack.c.l.b16 %v1788
    %v1797 = vunpack.c.h.b16 %v1785
    %v1798 = vunpack.c.h.b16 %v1786
    %v1799 = vunpack.c.h.b16 %v1787
    %v1800 = vunpack.c.h.b16 %v1788
    %v1801 = vpack.c.b16 %v1794, %v1793
    %v1802 = vpack.c.b16 %v1796, %v1795
    %v1803 = vpack.c.b16 %v1798, %v1797
    %v1804 = vpack.c.b16 %v1800, %v1799
    %s1809 = scalar_lea.vmem [#allocation8], 224
    %1810 = vst [vmem:[%s1809] sm:$0xff] %v1801
    %1811 = vst [vmem:[%s1809 + $0x8] sm:$0xff] %v1802
    %1812 = vst [vmem:[%s1809 + $0x10] sm:$0xff] %v1803
    %1813 = vst [vmem:[%s1809 + $0x18] sm:$0xff] %v1804
    // Predicated region
    $region26: #{tpu_custom_call.1} parent=1 // pred_check
      _
    $region27: #{tpu_custom_call.1} parent=1 // pred_check_branch
      %1815 = sbr.rel (0) target = $region29
    $region28: #{tpu_custom_call.1} parent=1 // pred_region
      %s1817 = ssub.s32 4096, 4096
      %1818 = vsyncadd [#allocation4], %s1817
      %s1819 = sshll.u32 [#allocation8], 4
      %s1820 = int_to_ptr.vmem [resolvable:$true] %s1819
      %1825 = dma.vmem_to_hbm [thread:$0]  %s1820, 4096, %s3, [#allocation4], 256, 256, 16
    $region29: #{tpu_custom_call.1} parent=1 // pred_fallthru
      _
    // Predicated region
    $region30: #{tpu_custom_call.1} parent=1 // pred_check
      _
    $region31: #{tpu_custom_call.1} parent=1 // pred_check_branch
      %1827 = sbr.rel (0) target = $region33
    $region32: #{tpu_custom_call.1} parent=1 // pred_region
      %1828 = dma.done [#allocation4], 4096
    $region33: #{tpu_custom_call.1} parent=1 // pred_fallthru
      _
    %1829 = vsyncpa [#allocation3], 1
    %1830 = vsyncpa [#allocation6], 1
    %1831 = vsyncpa [#allocation4], 1

</llo_original>
